<compile_context>
chip_gen: v6e
topology: v6e:2x2x1
jax: 0.10.0
libtpu: 0.0.40
codegen_flags: <defaults>
</compile_context>

<pallas_src>
import jax
import jax.numpy as jnp
from jax.experimental import pallas as pl
from jax.experimental.pallas import tpu as pltpu

EPS = 1e-5           # nn.LayerNorm default
HID = 512            # lane-padded width of the concatenated hidden vector (true 450)
NSEG = 8             # stat columns (6 segments used, 2 spare)
IN_W = 64            # packed input width: 4*12 + 3 + 3 = 54, padded to 64
# contiguous lane layout == torch.cat order: cd | sd | cs | ss | sv | ov | pad
SEGS = ((0, 100), (100, 200), (200, 300), (300, 400), (400, 425), (425, 450))


def _round_up(n, m):
    return ((n + m - 1) // m) * m


def _nbytes(a):
    return int(a.size) * a.dtype.itemsize


# ----------------------------------------------------------------------------
# Kernel
# ----------------------------------------------------------------------------
def critic_kernel(
    x_ref,                                   # (tm, 64) packed inputs, bf16
    w1_ref, b1_ref,                          # fused fc1/split_value/offset_value
    m_ref, invn_ref, mtg_ref, beta1_ref,     # segmented LayerNorm machinery
    w2_ref, b2_ref, g2_ref, be2_ref,         # fc2 + bn2 (lane-padded to 512)
    wq_ref, bq_ref,                          # q head
    out_ref,                                 # (tm, 1) f32
):
    # --- fc1 for all 4 branches + both 3->25 heads: ONE bf16 MXU matmul -----
    h = jnp.dot(x_ref[...], w1_ref[...],
                preferred_element_type=jnp.float32) + b1_ref[...]

    # --- 6 segment LayerNorms, one-pass stats (E[x^2] - mu^2) ---------------
    hb = h.astype(jnp.bfloat16)
    s1 = jnp.dot(hb, m_ref[...], preferred_element_type=jnp.float32)        # seg sums
    s2 = jnp.dot(hb * hb, m_ref[...], preferred_element_type=jnp.float32)   # seg sumsq
    mu = s1 * invn_ref[...]
    var = jnp.maximum(s2 * invn_ref[...] - mu * mu, 0.0)
    rstd = jax.lax.rsqrt(var + EPS)
    # broadcast per-segment (rstd*gamma) / (mu*rstd*gamma) back onto their lanes
    scale = jnp.dot(rstd.astype(jnp.bfloat16), mtg_ref[...],
                    preferred_element_type=jnp.float32)
    shift = jnp.dot((mu * rstd).astype(jnp.bfloat16), mtg_ref[...],
                    preferred_element_type=jnp.float32)
    # (h - mu) * rstd * gamma + beta, then ReLU; pad lanes end up exactly 0.
    h_act = jnp.maximum(h * scale - shift + beta1_ref[...], 0.0).astype(jnp.bfloat16)

    # --- fc2: single K=512 bf16 matmul (true K=450; pad rows of W2 are zero) -
    acc = jnp.dot(h_act, w2_ref[...],
                  preferred_element_type=jnp.float32) + b2_ref[...]

    # --- bn2 = LayerNorm(450): masked one-pass stats (pad lanes are zero) ----
    mu2 = jnp.sum(acc, axis=-1, keepdims=True) * (1.0 / 450.0)
    ex2 = jnp.sum(acc * acc, axis=-1, keepdims=True) * (1.0 / 450.0)
    rstd2 = jax.lax.rsqrt(jnp.maximum(ex2 - mu2 * mu2, 0.0) + EPS)
    h2 = jnp.maximum((acc - mu2) * rstd2 * g2_ref[...] + be2_ref[...], 0.0)

    # --- q head (N=1): VPU multiply + lane reduce; pad lanes carry zero weight
    # (kept as a (tm, 1) store; a lane-dense (1, tm) layout would need an
    #  in-kernel transpose — skipped as a negligible-perf / lowering-risk item)
    out_ref[...] = jnp.sum(h2 * wq_ref[...], axis=-1, keepdims=True) + bq_ref[...]


# ----------------------------------------------------------------------------
# Parameters (PyTorch nn.Linear / nn.LayerNorm defaults)
# ----------------------------------------------------------------------------
def _linear_init(key, fan_in, fan_out):
    k1, k2 = jax.random.split(key)
    bound = 1.0 / float(fan_in) ** 0.5
    w = jax.random.uniform(k1, (fan_in, fan_out), jnp.float32, -bound, bound)
    b = jax.random.uniform(k2, (1, fan_out), jnp.float32, -bound, bound)
    return w, b


def init_critic_params(seed=0):
    keys = jax.random.split(jax.random.PRNGKey(seed), 8)
    p = {}
    p["w1"], p["b1"] = _linear_init(keys[0], 12, 100)
    p["g1"] = jnp.ones((1, 100), jnp.float32)
    p["be1"] = jnp.zeros((1, 100), jnp.float32)
    p["wsp"], p["bsp"] = _linear_init(keys[1], 3, 25)
    p["wof"], p["bof"] = _linear_init(keys[2], 3, 25)
    p["g"] = jnp.ones((1, 25), jnp.float32)
    p["be"] = jnp.zeros((1, 25), jnp.float32)
    p["w2"], p["b2"] = _linear_init(keys[3], 450, 450)
    p["g2"] = jnp.ones((1, 450), jnp.float32)
    p["be2"] = jnp.zeros((1, 450), jnp.float32)
    p["wq"], p["bq"] = _linear_init(keys[4], 450, 1)
    return p


def pack_critic_params(p):
    """One-time packing: block-diagonal fc1, membership/broadcast matrices,
    W2/bn2/q lane-padded 450 -> 512.  All MXU operands stored in bf16."""
    f32, bf16 = jnp.float32, jnp.bfloat16

    # fused fc1 | split_value | offset_value weight (64, 512)
    w1big = jnp.zeros((IN_W, HID), f32)
    for br in range(4):
        w1big = w1big.at[br * 12:(br + 1) * 12, br * 100:(br + 1) * 100].set(p["w1"])
    w1big = w1big.at[48:51, 400:425].set(p["wsp"])
    w1big = w1big.at[51:54, 425:450].set(p["wof"])

    b1big = jnp.zeros((1, HID), f32)
    b1big = b1big.at[:, 0:400].set(jnp.tile(p["b1"], (1, 4)))
    b1big = b1big.at[:, 400:425].set(p["bsp"])
    b1big = b1big.at[:, 425:450].set(p["bof"])

    gamma1 = jnp.zeros((1, HID), f32)
    gamma1 = gamma1.at[:, 0:400].set(jnp.tile(p["g1"], (1, 4)))
    gamma1 = gamma1.at[:, 400:450].set(jnp.tile(p["g"], (1, 2)))
    beta1 = jnp.zeros((1, HID), f32)
    beta1 = beta1.at[:, 0:400].set(jnp.tile(p["be1"], (1, 4)))
    beta1 = beta1.at[:, 400:450].set(jnp.tile(p["be"], (1, 2)))

    # segment membership (512, 8), 1/count, and gamma-scaled transpose (8, 512)
    m = jnp.zeros((HID, NSEG), f32)
    invn = jnp.zeros((1, NSEG), f32)
    for s, (a, b) in enumerate(SEGS):
        m = m.at[a:b, s].set(1.0)
        invn = invn.at[0, s].set(1.0 / (b - a))
    mtg = m.T * gamma1               # gamma folded into the broadcast matmul

    # fc2 / bn2 / q, lane-padded 450 -> 512 with zero rows / cols
    w2big = jnp.zeros((HID, HID), f32).at[0:450, 0:450].set(p["w2"])
    b2 = jnp.zeros((1, HID), f32).at[:, 0:450].set(p["b2"])
    g2 = jnp.zeros((1, HID), f32).at[:, 0:450].set(p["g2"])
    be2 = jnp.zeros((1, HID), f32).at[:, 0:450].set(p["be2"])
    wq = jnp.zeros((1, HID), f32).at[:, 0:450].set(p["wq"].T)

    return {
        "w1": w1big.astype(bf16), "b1": b1big,
        "m": m.astype(bf16), "invn": invn,
        "mtg": mtg.astype(bf16), "beta1": beta1,
        "w2": w2big.astype(bf16), "b2": b2, "g2": g2, "be2": be2,
        "wq": wq, "bq": p["bq"],
    }


_PARAM_ORDER = ("w1", "b1", "m", "invn", "mtg", "beta1",
                "w2", "b2", "g2", "be2", "wq", "bq")


def _const_spec(arr):
    """Whole-array block, constant index_map -> VMEM-resident across the grid.
    (pl.Buffered(1) would halve its VMEM; skipped — <0.5 MiB total here.)"""
    idx = (0,) * arr.ndim
    return pl.BlockSpec(arr.shape, lambda i, _idx=idx: _idx)


# ----------------------------------------------------------------------------
# Wrapper
# ----------------------------------------------------------------------------
def critic_forward(packed, car_d, scooter_d, car_s, scooter_s, splits, offsets,
                   *, tm=1024):
    B = car_d.shape[0]
    # Batch tile: multiple of 8; capped so the "parallel" grid has >= 2 steps
    # whenever the batch allows it (keeps both v7x TensorCores busy).
    half = -(-B // 2)                                     # cdiv(B, 2)
    tm = max(8, min(_round_up(tm, 8), _round_up(half, 8)))
    B_pad = _round_up(B, tm)
    nT = B_pad // tm

    # Pack all six inputs into ONE lane-contiguous (B_pad, 64) slab -> one DMA
    # and one fc1 matmul per tile (bf16 operands for the MXU).
    x = jnp.concatenate([car_d, scooter_d, car_s, scooter_s, splits, offsets],
                        axis=1)
    x = jnp.pad(x, ((0, B_pad - B), (0, IN_W - x.shape[1]))).astype(jnp.bfloat16)

    param_args = [packed[k] for k in _PARAM_ORDER]
    in_specs = [pl.BlockSpec((tm, IN_W), lambda i: (i, 0))] + \
               [_const_spec(a) for a in param_args]

    flops = 2 * B_pad * (IN_W * HID + 4 * NSEG * HID + HID * HID + HID)
    bytes_accessed = (_nbytes(x) + B_pad * 4
                      + sum(_nbytes(a) for a in param_args))
    cost = pl.CostEstimate(flops=flops, transcendentals=9 * B_pad,
                           bytes_accessed=bytes_accessed)

    out = pl.pallas_call(
        critic_kernel,
        out_shape=jax.ShapeDtypeStruct((B_pad, 1), jnp.float32),
        grid=(nT,),
        in_specs=in_specs,
        out_specs=pl.BlockSpec((tm, 1), lambda i: (i, 0)),
        compiler_params=pltpu.CompilerParams(
            dimension_semantics=("parallel",),
            vmem_limit_bytes=40 * 1024 * 1024),
        cost_estimate=cost,
    )(x, *param_args)
    return out[:B]


# ----------------------------------------------------------------------------
# Plain-JAX references (mirror the PyTorch forward)
# ----------------------------------------------------------------------------
def _reference_forward(params, car_d, scooter_d, car_s, scooter_s, splits,
                       offsets, *, bf16_matmuls=False):
    mm_dtype = jnp.bfloat16 if bf16_matmuls else jnp.float32

    def mm(x, w):
        return jnp.dot(x.astype(mm_dtype), w.astype(mm_dtype),
                       preferred_element_type=jnp.float32)

    def ln(x, g, b):
        mu = jnp.mean(x, -1, keepdims=True)
        var = jnp.mean((x - mu) ** 2, -1, keepdims=True)
        return (x - mu) / jnp.sqrt(var + EPS) * g + b

    def branch(x):
        return jax.nn.relu(ln(mm(x, params["w1"]) + params["b1"],
                              params["g1"], params["be1"]))

    cd, sd, cs, ss = (branch(car_d), branch(scooter_d),
                      branch(car_s), branch(scooter_s))
    sv = jax.nn.relu(ln(mm(splits, params["wsp"]) + params["bsp"],
                        params["g"], params["be"]))
    ov = jax.nn.relu(ln(mm(offsets, params["wof"]) + params["bof"],
                        params["g"], params["be"]))
    x = jnp.concatenate([cd, sd, cs, ss, sv, ov], axis=1)
    x = jax.nn.relu(ln(mm(x, params["w2"]) + params["b2"],
                       params["g2"], params["be2"]))
    return x @ params["wq"] + params["bq"]      # q head stays f32 in the kernel


if __name__ == "__main__":
    key = jax.random.PRNGKey(0)
    params = init_critic_params(seed=0)
    packed = pack_critic_params(params)

    # --- small-batch check (B=2) --------------------------------------------
    ks = jax.random.split(key, 6)
    B = 2
    car_d = jax.random.normal(ks[0], (B, 12), jnp.float32)
    scooter_d = jax.random.normal(ks[1], (B, 12), jnp.float32)
    car_s = jax.random.normal(ks[2], (B, 12), jnp.float32)
    scooter_s = jax.random.normal(ks[3], (B, 12), jnp.float32)
    splits = jax.random.normal(ks[4], (B, 3), jnp.float32)
    offsets = jax.random.normal(ks[5], (B, 3), jnp.float32)

    out = critic_forward(packed, car_d, scooter_d, car_s, scooter_s,
                         splits, offsets)
    out = jax.block_until_ready(out)
    assert out.shape == (B, 1)

    ref_bf16 = _reference_forward(params, car_d, scooter_d, car_s, scooter_s,
                                  splits, offsets, bf16_matmuls=True)
    ref_f32 = _reference_forward(params, car_d, scooter_d, car_s, scooter_s,
                                 splits, offsets, bf16_matmuls=False)
    assert jnp.allclose(out, ref_bf16, atol=2.5e-2, rtol=2.5e-2), (out, ref_bf16)
    assert jnp.allclose(out, ref_f32, atol=7.5e-2, rtol=7.5e-2), (out, ref_f32)

    # --- multi-tile check (B=300 -> 2 grid steps, padded rows) ---------------
    ks2 = jax.random.split(jax.random.PRNGKey(1), 6)
    B2 = 300
    args2 = (jax.random.normal(ks2[0], (B2, 12), jnp.float32),
             jax.random.normal(ks2[1], (B2, 12), jnp.float32),
             jax.random.normal(ks2[2], (B2, 12), jnp.float32),
             jax.random.normal(ks2[3], (B2, 12), jnp.float32),
             jax.random.normal(ks2[4], (B2, 3), jnp.float32),
             jax.random.normal(ks2[5], (B2, 3), jnp.float32))
    out2 = jax.block_until_ready(critic_forward(packed, *args2))
    ref2 = _reference_forward(params, *args2, bf16_matmuls=True)
    assert out2.shape == (B2, 1)
    assert jnp.allclose(out2, ref2, atol=4e-2, rtol=4e-2)

    print("KERNEL_OK")
</pallas_src>

<mosaic_0001>
module attributes {stable_mosaic.version = 11 : i64} {
  func.func @critic_kernel(%arg0: i32, %arg1: memref<8x64xbf16, #tpu.memory_space<vmem>>, %arg2: memref<64x512xbf16, #tpu.memory_space<vmem>>, %arg3: memref<1x512xf32, #tpu.memory_space<vmem>>, %arg4: memref<512x8xbf16, #tpu.memory_space<vmem>>, %arg5: memref<1x8xf32, #tpu.memory_space<vmem>>, %arg6: memref<8x512xbf16, #tpu.memory_space<vmem>>, %arg7: memref<1x512xf32, #tpu.memory_space<vmem>>, %arg8: memref<512x512xbf16, #tpu.memory_space<vmem>>, %arg9: memref<1x512xf32, #tpu.memory_space<vmem>>, %arg10: memref<1x512xf32, #tpu.memory_space<vmem>>, %arg11: memref<1x512xf32, #tpu.memory_space<vmem>>, %arg12: memref<1x512xf32, #tpu.memory_space<vmem>>, %arg13: memref<1x1xf32, #tpu.memory_space<vmem>>, %arg14: memref<8x1xf32, #tpu.memory_space<vmem>>) attributes {dimension_semantics = [#tpu.dimension_semantics<parallel>], iteration_bounds = array<i64: 1>, scalar_prefetch = 0 : i64, scratch_operands = 0 : i64, tpu.core_type = #tpu.core_type<tc>, window_params = [{transform_indices = @transform_0, window_bounds = array<i64: 8, 64>}, {pipeline_mode = #tpu.pipeline_mode<synchronous>, transform_indices = @transform_1, window_bounds = array<i64: 64, 512>}, {pipeline_mode = #tpu.pipeline_mode<synchronous>, transform_indices = @transform_2, window_bounds = array<i64: 1, 512>}, {pipeline_mode = #tpu.pipeline_mode<synchronous>, transform_indices = @transform_3, window_bounds = array<i64: 512, 8>}, {pipeline_mode = #tpu.pipeline_mode<synchronous>, transform_indices = @transform_4, window_bounds = array<i64: 1, 8>}, {pipeline_mode = #tpu.pipeline_mode<synchronous>, transform_indices = @transform_5, window_bounds = array<i64: 8, 512>}, {pipeline_mode = #tpu.pipeline_mode<synchronous>, transform_indices = @transform_6, window_bounds = array<i64: 1, 512>}, {pipeline_mode = #tpu.pipeline_mode<synchronous>, transform_indices = @transform_7, window_bounds = array<i64: 512, 512>}, {pipeline_mode = #tpu.pipeline_mode<synchronous>, transform_indices = @transform_8, window_bounds = array<i64: 1, 512>}, {pipeline_mode = #tpu.pipeline_mode<synchronous>, transform_indices = @transform_9, window_bounds = array<i64: 1, 512>}, {pipeline_mode = #tpu.pipeline_mode<synchronous>, transform_indices = @transform_10, window_bounds = array<i64: 1, 512>}, {pipeline_mode = #tpu.pipeline_mode<synchronous>, transform_indices = @transform_11, window_bounds = array<i64: 1, 512>}, {pipeline_mode = #tpu.pipeline_mode<synchronous>, transform_indices = @transform_12, window_bounds = array<i64: 1, 1>}, {transform_indices = @transform_13, window_bounds = array<i64: 8, 1>}]} {
    %c0 = arith.constant 0 : index
    %c0_0 = arith.constant 0 : index
    %0 = vector.load %arg1[%c0, %c0_0] : memref<8x64xbf16, #tpu.memory_space<vmem>>, vector<8x64xbf16>
    %c0_1 = arith.constant 0 : index
    %c0_2 = arith.constant 0 : index
    %1 = vector.load %arg2[%c0_1, %c0_2] : memref<64x512xbf16, #tpu.memory_space<vmem>>, vector<64x512xbf16>
    %cst = arith.constant dense<0.000000e+00> : vector<8x512xf32>
    %2 = tpu.matmul %0, %1, %cst {dimension_numbers = #tpu.dot_dimension_numbers<[1], [0], [0], [1], [0, 0, 1, 1], [], []>} : vector<8x64xbf16>, vector<64x512xbf16>, vector<8x512xf32> -> vector<8x512xf32>
    %c0_3 = arith.constant 0 : index
    %c0_4 = arith.constant 0 : index
    %3 = vector.load %arg3[%c0_3, %c0_4] : memref<1x512xf32, #tpu.memory_space<vmem>>, vector<1x512xf32>
    %4 = vector.broadcast %3 : vector<1x512xf32> to vector<8x512xf32>
    %5 = arith.addf %2, %4 : vector<8x512xf32>
    %6 = arith.truncf %5 : vector<8x512xf32> to vector<8x512xbf16>
    %c0_5 = arith.constant 0 : index
    %c0_6 = arith.constant 0 : index
    %7 = vector.load %arg4[%c0_5, %c0_6] : memref<512x8xbf16, #tpu.memory_space<vmem>>, vector<512x8xbf16>
    %cst_7 = arith.constant dense<0.000000e+00> : vector<8x8xf32>
    %8 = tpu.matmul %6, %7, %cst_7 {dimension_numbers = #tpu.dot_dimension_numbers<[1], [0], [0], [1], [0, 0, 1, 1], [], []>} : vector<8x512xbf16>, vector<512x8xbf16>, vector<8x8xf32> -> vector<8x8xf32>
    %9 = arith.mulf %6, %6 : vector<8x512xbf16>
    %c0_8 = arith.constant 0 : index
    %c0_9 = arith.constant 0 : index
    %10 = vector.load %arg4[%c0_8, %c0_9] : memref<512x8xbf16, #tpu.memory_space<vmem>>, vector<512x8xbf16>
    %cst_10 = arith.constant dense<0.000000e+00> : vector<8x8xf32>
    %11 = tpu.matmul %9, %10, %cst_10 {dimension_numbers = #tpu.dot_dimension_numbers<[1], [0], [0], [1], [0, 0, 1, 1], [], []>} : vector<8x512xbf16>, vector<512x8xbf16>, vector<8x8xf32> -> vector<8x8xf32>
    %c0_11 = arith.constant 0 : index
    %c0_12 = arith.constant 0 : index
    %12 = vector.load %arg5[%c0_11, %c0_12] : memref<1x8xf32, #tpu.memory_space<vmem>>, vector<1x8xf32>
    %13 = vector.broadcast %12 : vector<1x8xf32> to vector<8x8xf32>
    %14 = arith.mulf %8, %13 : vector<8x8xf32>
    %c0_13 = arith.constant 0 : index
    %c0_14 = arith.constant 0 : index
    %15 = vector.load %arg5[%c0_13, %c0_14] : memref<1x8xf32, #tpu.memory_space<vmem>>, vector<1x8xf32>
    %16 = vector.broadcast %15 : vector<1x8xf32> to vector<8x8xf32>
    %17 = arith.mulf %11, %16 : vector<8x8xf32>
    %18 = arith.mulf %14, %14 : vector<8x8xf32>
    %19 = arith.subf %17, %18 : vector<8x8xf32>
    %cst_15 = arith.constant 0.000000e+00 : f32
    %20 = vector.broadcast %cst_15 : f32 to vector<8x8xf32>
    %21 = arith.maximumf %19, %20 : vector<8x8xf32>
    %cst_16 = arith.constant 9.99999974E-6 : f32
    %22 = vector.broadcast %cst_16 : f32 to vector<8x8xf32>
    %23 = arith.addf %21, %22 : vector<8x8xf32>
    %24 = math.rsqrt %23 : vector<8x8xf32>
    %25 = arith.truncf %24 : vector<8x8xf32> to vector<8x8xbf16>
    %c0_17 = arith.constant 0 : index
    %c0_18 = arith.constant 0 : index
    %26 = vector.load %arg6[%c0_17, %c0_18] : memref<8x512xbf16, #tpu.memory_space<vmem>>, vector<8x512xbf16>
    %cst_19 = arith.constant dense<0.000000e+00> : vector<8x512xf32>
    %27 = tpu.matmul %25, %26, %cst_19 {dimension_numbers = #tpu.dot_dimension_numbers<[1], [0], [0], [1], [0, 0, 1, 1], [], []>} : vector<8x8xbf16>, vector<8x512xbf16>, vector<8x512xf32> -> vector<8x512xf32>
    %28 = arith.mulf %14, %24 : vector<8x8xf32>
    %29 = arith.truncf %28 : vector<8x8xf32> to vector<8x8xbf16>
    %c0_20 = arith.constant 0 : index
    %c0_21 = arith.constant 0 : index
    %30 = vector.load %arg6[%c0_20, %c0_21] : memref<8x512xbf16, #tpu.memory_space<vmem>>, vector<8x512xbf16>
    %cst_22 = arith.constant dense<0.000000e+00> : vector<8x512xf32>
    %31 = tpu.matmul %29, %30, %cst_22 {dimension_numbers = #tpu.dot_dimension_numbers<[1], [0], [0], [1], [0, 0, 1, 1], [], []>} : vector<8x8xbf16>, vector<8x512xbf16>, vector<8x512xf32> -> vector<8x512xf32>
    %32 = arith.mulf %5, %27 : vector<8x512xf32>
    %33 = arith.subf %32, %31 : vector<8x512xf32>
    %c0_23 = arith.constant 0 : index
    %c0_24 = arith.constant 0 : index
    %34 = vector.load %arg7[%c0_23, %c0_24] : memref<1x512xf32, #tpu.memory_space<vmem>>, vector<1x512xf32>
    %35 = vector.broadcast %34 : vector<1x512xf32> to vector<8x512xf32>
    %36 = arith.addf %33, %35 : vector<8x512xf32>
    %cst_25 = arith.constant 0.000000e+00 : f32
    %37 = vector.broadcast %cst_25 : f32 to vector<8x512xf32>
    %38 = arith.maximumf %36, %37 : vector<8x512xf32>
    %39 = arith.truncf %38 : vector<8x512xf32> to vector<8x512xbf16>
    %c0_26 = arith.constant 0 : index
    %c0_27 = arith.constant 0 : index
    %40 = vector.load %arg8[%c0_26, %c0_27] : memref<512x512xbf16, #tpu.memory_space<vmem>>, vector<512x512xbf16>
    %cst_28 = arith.constant dense<0.000000e+00> : vector<8x512xf32>
    %41 = tpu.matmul %39, %40, %cst_28 {dimension_numbers = #tpu.dot_dimension_numbers<[1], [0], [0], [1], [0, 0, 1, 1], [], []>} : vector<8x512xbf16>, vector<512x512xbf16>, vector<8x512xf32> -> vector<8x512xf32>
    %c0_29 = arith.constant 0 : index
    %c0_30 = arith.constant 0 : index
    %42 = vector.load %arg9[%c0_29, %c0_30] : memref<1x512xf32, #tpu.memory_space<vmem>>, vector<1x512xf32>
    %43 = vector.broadcast %42 : vector<1x512xf32> to vector<8x512xf32>
    %44 = arith.addf %41, %43 : vector<8x512xf32>
    %cst_31 = arith.constant dense<0.000000e+00> : vector<8xf32>
    %45 = vector.multi_reduction <add>, %44, %cst_31 [1] : vector<8x512xf32> to vector<8xf32>
    %46 = vector.shape_cast %45 : vector<8xf32> to vector<8x1xf32>
    %cst_32 = arith.constant 0.00222222228 : f32
    %47 = vector.broadcast %cst_32 : f32 to vector<8x1xf32>
    %48 = arith.mulf %46, %47 : vector<8x1xf32>
    %49 = arith.mulf %44, %44 : vector<8x512xf32>
    %cst_33 = arith.constant dense<0.000000e+00> : vector<8xf32>
    %50 = vector.multi_reduction <add>, %49, %cst_33 [1] : vector<8x512xf32> to vector<8xf32>
    %51 = vector.shape_cast %50 : vector<8xf32> to vector<8x1xf32>
    %cst_34 = arith.constant 0.00222222228 : f32
    %52 = vector.broadcast %cst_34 : f32 to vector<8x1xf32>
    %53 = arith.mulf %51, %52 : vector<8x1xf32>
    %54 = arith.mulf %48, %48 : vector<8x1xf32>
    %55 = arith.subf %53, %54 : vector<8x1xf32>
    %cst_35 = arith.constant 0.000000e+00 : f32
    %56 = vector.broadcast %cst_35 : f32 to vector<8x1xf32>
    %57 = arith.maximumf %55, %56 : vector<8x1xf32>
    %cst_36 = arith.constant 9.99999974E-6 : f32
    %58 = vector.broadcast %cst_36 : f32 to vector<8x1xf32>
    %59 = arith.addf %57, %58 : vector<8x1xf32>
    %60 = math.rsqrt %59 : vector<8x1xf32>
    %61 = vector.broadcast %48 : vector<8x1xf32> to vector<8x512xf32>
    %62 = arith.subf %44, %61 : vector<8x512xf32>
    %63 = vector.broadcast %60 : vector<8x1xf32> to vector<8x512xf32>
    %64 = arith.mulf %62, %63 : vector<8x512xf32>
    %c0_37 = arith.constant 0 : index
    %c0_38 = arith.constant 0 : index
    %65 = vector.load %arg10[%c0_37, %c0_38] : memref<1x512xf32, #tpu.memory_space<vmem>>, vector<1x512xf32>
    %66 = vector.broadcast %65 : vector<1x512xf32> to vector<8x512xf32>
    %67 = arith.mulf %64, %66 : vector<8x512xf32>
    %c0_39 = arith.constant 0 : index
    %c0_40 = arith.constant 0 : index
    %68 = vector.load %arg11[%c0_39, %c0_40] : memref<1x512xf32, #tpu.memory_space<vmem>>, vector<1x512xf32>
    %69 = vector.broadcast %68 : vector<1x512xf32> to vector<8x512xf32>
    %70 = arith.addf %67, %69 : vector<8x512xf32>
    %cst_41 = arith.constant 0.000000e+00 : f32
    %71 = vector.broadcast %cst_41 : f32 to vector<8x512xf32>
    %72 = arith.maximumf %70, %71 : vector<8x512xf32>
    %c0_42 = arith.constant 0 : index
    %c0_43 = arith.constant 0 : index
    %73 = vector.load %arg12[%c0_42, %c0_43] : memref<1x512xf32, #tpu.memory_space<vmem>>, vector<1x512xf32>
    %74 = vector.broadcast %73 : vector<1x512xf32> to vector<8x512xf32>
    %75 = arith.mulf %72, %74 : vector<8x512xf32>
    %cst_44 = arith.constant dense<0.000000e+00> : vector<8xf32>
    %76 = vector.multi_reduction <add>, %75, %cst_44 [1] : vector<8x512xf32> to vector<8xf32>
    %77 = vector.shape_cast %76 : vector<8xf32> to vector<8x1xf32>
    %c0_45 = arith.constant 0 : index
    %c0_46 = arith.constant 0 : index
    %78 = vector.load %arg13[%c0_45, %c0_46] : memref<1x1xf32, #tpu.memory_space<vmem>>, vector<1x1xf32>
    %79 = vector.broadcast %78 : vector<1x1xf32> to vector<8x1xf32>
    %80 = arith.addf %77, %79 : vector<8x1xf32>
    %c0_47 = arith.constant 0 : index
    %c0_48 = arith.constant 0 : index
    %81 = vector.load %arg14[%c0_47, %c0_48] : memref<8x1xf32, #tpu.memory_space<vmem>>, vector<8x1xf32>
    tpu.vector_store %arg14[%c0_47, %c0_48], %80 {strides = array<i32>} : memref<8x1xf32, #tpu.memory_space<vmem>>, vector<8x1xf32>,
    return
  }
  func.func @transform_0(%arg0: i32) -> (i32, i32) {
    %c0_i32 = arith.constant 0 : i32
    %c0_i32_0 = arith.constant 0 : i32
    return %arg0, %c0_i32 : i32, i32
  }
  func.func @transform_1(%arg0: i32) -> (i32, i32) {
    %c0_i32 = arith.constant 0 : i32
    %c0_i32_0 = arith.constant 0 : i32
    %c0_i32_1 = arith.constant 0 : i32
    return %c0_i32, %c0_i32_0 : i32, i32
  }
  func.func @transform_2(%arg0: i32) -> (i32, i32) {
    %c0_i32 = arith.constant 0 : i32
    %c0_i32_0 = arith.constant 0 : i32
    %c0_i32_1 = arith.constant 0 : i32
    return %c0_i32, %c0_i32_0 : i32, i32
  }
  func.func @transform_3(%arg0: i32) -> (i32, i32) {
    %c0_i32 = arith.constant 0 : i32
    %c0_i32_0 = arith.constant 0 : i32
    %c0_i32_1 = arith.constant 0 : i32
    return %c0_i32, %c0_i32_0 : i32, i32
  }
  func.func @transform_4(%arg0: i32) -> (i32, i32) {
    %c0_i32 = arith.constant 0 : i32
    %c0_i32_0 = arith.constant 0 : i32
    %c0_i32_1 = arith.constant 0 : i32
    return %c0_i32, %c0_i32_0 : i32, i32
  }
  func.func @transform_5(%arg0: i32) -> (i32, i32) {
    %c0_i32 = arith.constant 0 : i32
    %c0_i32_0 = arith.constant 0 : i32
    %c0_i32_1 = arith.constant 0 : i32
    return %c0_i32, %c0_i32_0 : i32, i32
  }
  func.func @transform_6(%arg0: i32) -> (i32, i32) {
    %c0_i32 = arith.constant 0 : i32
    %c0_i32_0 = arith.constant 0 : i32
    %c0_i32_1 = arith.constant 0 : i32
    return %c0_i32, %c0_i32_0 : i32, i32
  }
  func.func @transform_7(%arg0: i32) -> (i32, i32) {
    %c0_i32 = arith.constant 0 : i32
    %c0_i32_0 = arith.constant 0 : i32
    %c0_i32_1 = arith.constant 0 : i32
    return %c0_i32, %c0_i32_0 : i32, i32
  }
  func.func @transform_8(%arg0: i32) -> (i32, i32) {
    %c0_i32 = arith.constant 0 : i32
    %c0_i32_0 = arith.constant 0 : i32
    %c0_i32_1 = arith.constant 0 : i32
    return %c0_i32, %c0_i32_0 : i32, i32
  }
  func.func @transform_9(%arg0: i32) -> (i32, i32) {
    %c0_i32 = arith.constant 0 : i32
    %c0_i32_0 = arith.constant 0 : i32
    %c0_i32_1 = arith.constant 0 : i32
    return %c0_i32, %c0_i32_0 : i32, i32
  }
  func.func @transform_10(%arg0: i32) -> (i32, i32) {
    %c0_i32 = arith.constant 0 : i32
    %c0_i32_0 = arith.constant 0 : i32
    %c0_i32_1 = arith.constant 0 : i32
    return %c0_i32, %c0_i32_0 : i32, i32
  }
  func.func @transform_11(%arg0: i32) -> (i32, i32) {
    %c0_i32 = arith.constant 0 : i32
    %c0_i32_0 = arith.constant 0 : i32
    %c0_i32_1 = arith.constant 0 : i32
    return %c0_i32, %c0_i32_0 : i32, i32
  }
  func.func @transform_12(%arg0: i32) -> (i32, i32) {
    %c0_i32 = arith.constant 0 : i32
    %c0_i32_0 = arith.constant 0 : i32
    %c0_i32_1 = arith.constant 0 : i32
    return %c0_i32, %c0_i32_0 : i32, i32
  }
  func.func @transform_13(%arg0: i32) -> (i32, i32) {
    %c0_i32 = arith.constant 0 : i32
    %c0_i32_0 = arith.constant 0 : i32
    return %arg0, %c0_i32 : i32, i32
  }
}

</mosaic_0001>

<llo_original>
// kernel: tpu_custom_call.1
$region0: #{tpu_custom_call.1}
  #allocation0 [shape = 'u32[]', space=smem, size = 0x4, offset = 0x4, fixed_abs, tag = 'smem constant byte address 0x4 - core index']
  #allocation1 [shape = 'u32[144,128]{1,0:T(1,128)}', space=vmem, size = 0x12000, scoped, tag = 'internal scratch']
  #allocation2 [shape = 'f32[1,1]{1,0:T(1,128)S(1)}', space=vmem, size = 0x200, scoped, tag = 'scoped memory for tpu_custom_call.1']
  %s0 = inlined_call_operand.vmem [shape: bf16[8,64], index: 0, kind: input, shape index: {}]
  %s1 = inlined_call_operand.vmem [shape: bf16[64,512], index: 1, kind: input, shape index: {}]
  %s2 = inlined_call_operand.vmem [shape: f32[1,512], index: 2, kind: input, shape index: {}]
  %s3 = inlined_call_operand.vmem [shape: bf16[512,8], index: 3, kind: input, shape index: {}]
  %s4 = inlined_call_operand.vmem [shape: f32[1,8], index: 4, kind: input, shape index: {}]
  %s5 = inlined_call_operand.vmem [shape: bf16[8,512], index: 5, kind: input, shape index: {}]
  %s6 = inlined_call_operand.vmem [shape: f32[1,512], index: 6, kind: input, shape index: {}]
  %s7 = inlined_call_operand.hbm [shape: bf16[512,512], index: 7, kind: input, shape index: {}]
  %s8 = inlined_call_operand.vmem [shape: f32[1,512], index: 8, kind: input, shape index: {}]
  %s9 = inlined_call_operand.vmem [shape: f32[1,512], index: 9, kind: input, shape index: {}]
  %s10 = inlined_call_operand.vmem [shape: f32[1,512], index: 10, kind: input, shape index: {}]
  %s11 = inlined_call_operand.vmem [shape: f32[1,512], index: 11, kind: input, shape index: {}]
  %s12 = inlined_call_operand.<no memory space> [shape: f32[1,1], index: 12, kind: input, shape index: {}]
  %s13 = inlined_call_operand.vmem [shape: f32[8,1], index: 13, kind: output, shape index: {}]
  %s14 = sld [smem:[#allocation0]]
  $region66: #{tpu_custom_call.1} parent=0
    _
  %s16 = ssub.s32 1, %s14
  %s17 = scalar_select 0, %s16, %s14
  %v18 = vstv %s12
  %19 = vst [vmem:[#allocation2] sm:$0x1] %v18
  $region1: #{tpu_custom_call.1} parent=0
    #allocation3 [shape = 'u8[524288]{0}', space=vmem, size = 0x80000, scoped, tag = 'input window, operand 7, single buffered']
    #allocation4 [shape = 's32[1]{0}', space=sflag, size = 0x4, scoped, tag = 'scoped memory for tpu_custom_call.1']
    %20 = vsyncpa [#allocation4], 0
    // Predicated region
    $region2: #{tpu_custom_call.1} parent=1 // pred_check
      _
    $region3: #{tpu_custom_call.1} parent=1 // pred_check_branch
      %22 = sbr.rel (0) target = $region5
    $region4: #{tpu_custom_call.1} parent=1 // pred_region
      _
    $region5: #{tpu_custom_call.1} parent=1 // pred_fallthru
      _
    // Predicated region
    $region6: #{tpu_custom_call.1} parent=1 // pred_check
      _
    $region7: #{tpu_custom_call.1} parent=1 // pred_check_branch
      %24 = sbr.rel (0) target = $region9
    $region8: #{tpu_custom_call.1} parent=1 // pred_region
      _
    $region9: #{tpu_custom_call.1} parent=1 // pred_fallthru
      _
    // Predicated region
    $region10: #{tpu_custom_call.1} parent=1 // pred_check
      _
    $region11: #{tpu_custom_call.1} parent=1 // pred_check_branch
      %26 = sbr.rel (0) target = $region13
    $region12: #{tpu_custom_call.1} parent=1 // pred_region
      _
    $region13: #{tpu_custom_call.1} parent=1 // pred_fallthru
      _
    // Predicated region
    $region14: #{tpu_custom_call.1} parent=1 // pred_check
      _
    $region15: #{tpu_custom_call.1} parent=1 // pred_check_branch
      %28 = sbr.rel (0) target = $region17
    $region16: #{tpu_custom_call.1} parent=1 // pred_region
      _
    $region17: #{tpu_custom_call.1} parent=1 // pred_fallthru
      _
    // Predicated region
    $region18: #{tpu_custom_call.1} parent=1 // pred_check
      _
    $region19: #{tpu_custom_call.1} parent=1 // pred_check_branch
      %30 = sbr.rel (0) target = $region21
    $region20: #{tpu_custom_call.1} parent=1 // pred_region
      _
    $region21: #{tpu_custom_call.1} parent=1 // pred_fallthru
      _
    // Predicated region
    $region22: #{tpu_custom_call.1} parent=1 // pred_check
      _
    $region23: #{tpu_custom_call.1} parent=1 // pred_check_branch
      %32 = sbr.rel (0) target = $region25
    $region24: #{tpu_custom_call.1} parent=1 // pred_region
      _
    $region25: #{tpu_custom_call.1} parent=1 // pred_fallthru
      _
    // Predicated region
    $region26: #{tpu_custom_call.1} parent=1 // pred_check
      _
    $region27: #{tpu_custom_call.1} parent=1 // pred_check_branch
      %34 = sbr.rel (0) target = $region29
    $region28: #{tpu_custom_call.1} parent=1 // pred_region
      _
    $region29: #{tpu_custom_call.1} parent=1 // pred_fallthru
      _
    // Predicated region
    $region30: #{tpu_custom_call.1} parent=1 // pred_check
      _
    $region31: #{tpu_custom_call.1} parent=1 // pred_check_branch
      %36 = sbr.rel (0) target = $region33
    $region32: #{tpu_custom_call.1} parent=1 // pred_region
      %s38 = ssub.s32 16384, 16384
      %39 = vsyncadd [#allocation4], %s38
      %s40 = sshll.u32 [#allocation3], 4
      %s41 = int_to_ptr.vmem [resolvable:$true] %s40
      %46 = dma.hbm_to_vmem [thread:$0]  %s7, 16384, %s41, [#allocation4], 256, 256, 16
    $region33: #{tpu_custom_call.1} parent=1 // pred_fallthru
      _
    // Predicated region
    $region34: #{tpu_custom_call.1} parent=1 // pred_check
      _
    $region35: #{tpu_custom_call.1} parent=1 // pred_check_branch
      %48 = sbr.rel (0) target = $region37
    $region36: #{tpu_custom_call.1} parent=1 // pred_region
      _
    $region37: #{tpu_custom_call.1} parent=1 // pred_fallthru
      _
    // Predicated region
    $region38: #{tpu_custom_call.1} parent=1 // pred_check
      _
    $region39: #{tpu_custom_call.1} parent=1 // pred_check_branch
      %50 = sbr.rel (0) target = $region41
    $region40: #{tpu_custom_call.1} parent=1 // pred_region
      _
    $region41: #{tpu_custom_call.1} parent=1 // pred_fallthru
      _
    // Predicated region
    $region42: #{tpu_custom_call.1} parent=1 // pred_check
      _
    $region43: #{tpu_custom_call.1} parent=1 // pred_check_branch
      %52 = sbr.rel (0) target = $region45
    $region44: #{tpu_custom_call.1} parent=1 // pred_region
      _
    $region45: #{tpu_custom_call.1} parent=1 // pred_fallthru
      _
    // Predicated region
    $region46: #{tpu_custom_call.1} parent=1 // pred_check
      _
    $region47: #{tpu_custom_call.1} parent=1 // pred_check_branch
      %54 = sbr.rel (0) target = $region49
    $region48: #{tpu_custom_call.1} parent=1 // pred_region
      _
    $region49: #{tpu_custom_call.1} parent=1 // pred_fallthru
      _
    // Predicated region
    $region50: #{tpu_custom_call.1} parent=1 // pred_check
      _
    $region51: #{tpu_custom_call.1} parent=1 // pred_check_branch
      %56 = sbr.rel (0) target = $region53
    $region52: #{tpu_custom_call.1} parent=1 // pred_region
      _
    $region53: #{tpu_custom_call.1} parent=1 // pred_fallthru
      _
    // Predicated region
    $region54: #{tpu_custom_call.1} parent=1 // pred_check
      _
    $region55: #{tpu_custom_call.1} parent=1 // pred_check_branch
      %58 = sbr.rel (0) target = $region57
    $region56: #{tpu_custom_call.1} parent=1 // pred_region
      %59 = dma.done [#allocation4], 16384
    $region57: #{tpu_custom_call.1} parent=1 // pred_fallthru
      _
    %v61 = vld [vmem:[%s0] sm:$0xf]
    %v62 = vld [vmem:[%s1] sm:$0xff]
    %v63 = vld [vmem:[%s1 + $0x8] sm:$0xff]
    %v64 = vld [vmem:[%s1 + $0x10] sm:$0xff]
    %v65 = vld [vmem:[%s1 + $0x18] sm:$0xff]
    %v66 = vld [vmem:[%s1 + $0x20] sm:$0xff]
    %v67 = vld [vmem:[%s1 + $0x28] sm:$0xff]
    %v68 = vld [vmem:[%s1 + $0x30] sm:$0xff]
    %v69 = vld [vmem:[%s1 + $0x38] sm:$0xff]
    %v70 = vld [vmem:[%s1 + $0x40] sm:$0xff]
    %v71 = vld [vmem:[%s1 + $0x48] sm:$0xff]
    %v72 = vld [vmem:[%s1 + $0x50] sm:$0xff]
    %v73 = vld [vmem:[%s1 + $0x58] sm:$0xff]
    %v74 = vld [vmem:[%s1 + $0x60] sm:$0xff]
    %v75 = vld [vmem:[%s1 + $0x68] sm:$0xff]
    %v76 = vld [vmem:[%s1 + $0x70] sm:$0xff]
    %v77 = vld [vmem:[%s1 + $0x78] sm:$0xff]
    %v78 = vld [vmem:[%s2] sm:$0xf]
    %v80 = vlaneseq
    %v81 = vshrl.u32 %v80, 7
    %v82 = vsub.s32 0, %v81
    %v83 = vrot.slane %v78, %v82
    %v84 = vlaneseq
    %v85 = vshrl.u32 %v84, 7
    %v86 = vsub.s32 1, %v85
    %v87 = vrot.slane %v78, %v86
    %v88 = vlaneseq
    %v89 = vshrl.u32 %v88, 7
    %v90 = vsub.s32 2, %v89
    %v91 = vrot.slane %v78, %v90
    %v92 = vlaneseq
    %v93 = vshrl.u32 %v92, 7
    %v94 = vsub.s32 3, %v93
    %v95 = vrot.slane %v78, %v94
    %v116 = vunpack.c.l.b16 %v62
    %v117 = vunpack.c.h.b16 %v62
    %v118 = vunpack.c.l.b16 %v63
    %v119 = vunpack.c.h.b16 %v63
    %v120 = vunpack.c.l.b16 %v64
    %v121 = vunpack.c.h.b16 %v64
    %v122 = vunpack.c.l.b16 %v65
    %v123 = vunpack.c.h.b16 %v65
    %v124 = vunpack.c.l.b16 %v66
    %v125 = vunpack.c.h.b16 %v66
    %v126 = vunpack.c.l.b16 %v67
    %v127 = vunpack.c.h.b16 %v67
    %v128 = vunpack.c.l.b16 %v68
    %v129 = vunpack.c.h.b16 %v68
    %v130 = vunpack.c.l.b16 %v69
    %v131 = vunpack.c.h.b16 %v69
    %v132 = vunpack.c.l.b16 %v70
    %v133 = vunpack.c.h.b16 %v70
    %v134 = vunpack.c.l.b16 %v71
    %v135 = vunpack.c.h.b16 %v71
    %v136 = vunpack.c.l.b16 %v72
    %v137 = vunpack.c.h.b16 %v72
    %v138 = vunpack.c.l.b16 %v73
    %v139 = vunpack.c.h.b16 %v73
    %v140 = vunpack.c.l.b16 %v74
    %v141 = vunpack.c.h.b16 %v74
    %v142 = vunpack.c.l.b16 %v75
    %v143 = vunpack.c.h.b16 %v75
    %v144 = vunpack.c.l.b16 %v76
    %v145 = vunpack.c.h.b16 %v76
    %v146 = vunpack.c.l.b16 %v77
    %v147 = vunpack.c.h.b16 %v77
    %v148 = vpack.c.b16 %v120, %v116
    %v149 = vpack.c.b16 %v121, %v117
    %v150 = vpack.c.b16 %v122, %v118
    %v151 = vpack.c.b16 %v123, %v119
    %v152 = vpack.c.b16 %v128, %v124
    %v153 = vpack.c.b16 %v129, %v125
    %v154 = vpack.c.b16 %v130, %v126
    %v155 = vpack.c.b16 %v131, %v127
    %v156 = vpack.c.b16 %v136, %v132
    %v157 = vpack.c.b16 %v137, %v133
    %v158 = vpack.c.b16 %v138, %v134
    %v159 = vpack.c.b16 %v139, %v135
    %v160 = vpack.c.b16 %v144, %v140
    %v161 = vpack.c.b16 %v145, %v141
    %v162 = vpack.c.b16 %v146, %v142
    %v163 = vpack.c.b16 %v147, %v143
    %vm180 = vcmask 523264
    %v182 = vsel %vm180, %v61, 0
    %184 = vmatprep.subr.bf16.mxu0 0
    %185 = vmatpush1.bf16.msra.mxu0 0
    %186 = vmatprep.subr.bf16.mxu0 0
    %187 = vmatpush1.bf16.msra.mxu0 0
    %188 = vmatprep.subr.bf16.mxu0 0
    %189 = vmatpush1.bf16.msra.mxu0 0
    %190 = vmatprep.subr.bf16.mxu0 0
    %191 = vmatpush1.bf16.msra.mxu0 0
    %192 = vmatprep.subr.bf16.mxu0 %v161
    %193 = vmatpush1.bf16.msra.mxu0 %v160
    %194 = vmatprep.subr.bf16.mxu0 %v157
    %195 = vmatpush1.bf16.msra.mxu0 %v156
    %196 = vmatprep.subr.bf16.mxu0 %v153
    %197 = vmatpush1.bf16.msra.mxu0 %v152
    %198 = vmatprep.subr.bf16.mxu0 %v149
    %199 = vmatpush1.bf16.msra.mxu0 %v148
    %200 = vmatprep.subr.bf16.mxu0 0
    %201 = vmatpush2.bf16.msra.mxu0 0
    %202 = vmatprep.subr.bf16.mxu0 0
    %203 = vmatpush2.bf16.msra.mxu0 0
    %204 = vmatprep.subr.bf16.mxu0 0
    %205 = vmatpush2.bf16.msra.mxu0 0
    %206 = vmatprep.subr.bf16.mxu0 0
    %207 = vmatpush2.bf16.msra.mxu0 0
    %208 = vmatprep.subr.bf16.mxu0 0
    %209 = vmatpush2.bf16.msra.mxu0 0
    %210 = vmatprep.subr.bf16.mxu0 0
    %211 = vmatpush2.bf16.msra.mxu0 0
    %212 = vmatprep.subr.bf16.mxu0 0
    %213 = vmatpush2.bf16.msra.mxu0 0
    %214 = vmatprep.subr.bf16.mxu0 0
    %215 = vmatpush2.bf16.msra.mxu0 0
    %216 = vmatprep.mubr.bf16.mxu0 0
    %217 = vmatmul.mubr.bf16.gmra.mxu0 %v182
    %v218 = vpop.f32.mrf.mxu0
    %v219 = vadd.f32 %v83, %v218
    %v220 = vpop.f32.mrf.mxu0
    %v221 = vadd.f32 %v87, %v220
    %v222 = vpop.f32.mrf.mxu0
    %v223 = vpop.f32.mrf.mxu0
    %224 = vdwg.mxu0
    %225 = vmatprep.subr.bf16.mxu0 0
    %226 = vmatpush1.bf16.msra.mxu0 0
    %227 = vmatprep.subr.bf16.mxu0 0
    %228 = vmatpush1.bf16.msra.mxu0 0
    %229 = vmatprep.subr.bf16.mxu0 0
    %230 = vmatpush1.bf16.msra.mxu0 0
    %231 = vmatprep.subr.bf16.mxu0 0
    %232 = vmatpush1.bf16.msra.mxu0 0
    %233 = vmatprep.subr.bf16.mxu0 %v163
    %234 = vmatpush1.bf16.msra.mxu0 %v162
    %235 = vmatprep.subr.bf16.mxu0 %v159
    %236 = vmatpush1.bf16.msra.mxu0 %v158
    %237 = vmatprep.subr.bf16.mxu0 %v155
    %238 = vmatpush1.bf16.msra.mxu0 %v154
    %239 = vmatprep.subr.bf16.mxu0 %v151
    %240 = vmatpush1.bf16.msra.mxu0 %v150
    %241 = vmatprep.subr.bf16.mxu0 0
    %242 = vmatpush2.bf16.msra.mxu0 0
    %243 = vmatprep.subr.bf16.mxu0 0
    %244 = vmatpush2.bf16.msra.mxu0 0
    %245 = vmatprep.subr.bf16.mxu0 0
    %246 = vmatpush2.bf16.msra.mxu0 0
    %247 = vmatprep.subr.bf16.mxu0 0
    %248 = vmatpush2.bf16.msra.mxu0 0
    %249 = vmatprep.subr.bf16.mxu0 0
    %250 = vmatpush2.bf16.msra.mxu0 0
    %251 = vmatprep.subr.bf16.mxu0 0
    %252 = vmatpush2.bf16.msra.mxu0 0
    %253 = vmatprep.subr.bf16.mxu0 0
    %254 = vmatpush2.bf16.msra.mxu0 0
    %255 = vmatprep.subr.bf16.mxu0 0
    %256 = vmatpush2.bf16.msra.mxu0 0
    %257 = vmatprep.mubr.bf16.mxu0 0
    %258 = vmatmul.mubr.bf16.gmra.mxu0 %v182
    %v259 = vpop.f32.mrf.mxu0
    %v260 = vadd.f32 %v91, %v259
    %v261 = vpop.f32.mrf.mxu0
    %v262 = vadd.f32 %v95, %v261
    %v263 = vpop.f32.mrf.mxu0
    %v264 = vpop.f32.mrf.mxu0
    %265 = vdwg.mxu0
    %v266 = vpack.c.bf16 %v219, %v219
    %v267 = vpack.c.bf16 %v221, %v221
    %v268 = vpack.c.bf16 %v260, %v260
    %v269 = vpack.c.bf16 %v262, %v262
    %v270 = vld [vmem:[%s3] sm:$0xf]
    %v271 = vld [vmem:[%s3 + $0x4] sm:$0xf]
    %v272 = vld [vmem:[%s3 + $0x8] sm:$0xf]
    %v273 = vld [vmem:[%s3 + $0xc] sm:$0xf]
    %v274 = vld [vmem:[%s3 + $0x10] sm:$0xf]
    %v275 = vld [vmem:[%s3 + $0x14] sm:$0xf]
    %v276 = vld [vmem:[%s3 + $0x18] sm:$0xf]
    %v277 = vld [vmem:[%s3 + $0x1c] sm:$0xf]
    %v278 = vld [vmem:[%s3 + $0x20] sm:$0xf]
    %v279 = vld [vmem:[%s3 + $0x24] sm:$0xf]
    %v280 = vld [vmem:[%s3 + $0x28] sm:$0xf]
    %v281 = vld [vmem:[%s3 + $0x2c] sm:$0xf]
    %v282 = vld [vmem:[%s3 + $0x30] sm:$0xf]
    %v283 = vld [vmem:[%s3 + $0x34] sm:$0xf]
    %v284 = vld [vmem:[%s3 + $0x38] sm:$0xf]
    %v285 = vld [vmem:[%s3 + $0x3c] sm:$0xf]
    %v286 = vld [vmem:[%s3 + $0x40] sm:$0xf]
    %v287 = vld [vmem:[%s3 + $0x44] sm:$0xf]
    %v288 = vld [vmem:[%s3 + $0x48] sm:$0xf]
    %v289 = vld [vmem:[%s3 + $0x4c] sm:$0xf]
    %v290 = vld [vmem:[%s3 + $0x50] sm:$0xf]
    %v291 = vld [vmem:[%s3 + $0x54] sm:$0xf]
    %v292 = vld [vmem:[%s3 + $0x58] sm:$0xf]
    %v293 = vld [vmem:[%s3 + $0x5c] sm:$0xf]
    %v294 = vld [vmem:[%s3 + $0x60] sm:$0xf]
    %v295 = vld [vmem:[%s3 + $0x64] sm:$0xf]
    %v296 = vld [vmem:[%s3 + $0x68] sm:$0xf]
    %v297 = vld [vmem:[%s3 + $0x6c] sm:$0xf]
    %v298 = vld [vmem:[%s3 + $0x70] sm:$0xf]
    %v299 = vld [vmem:[%s3 + $0x74] sm:$0xf]
    %v300 = vld [vmem:[%s3 + $0x78] sm:$0xf]
    %v301 = vld [vmem:[%s3 + $0x7c] sm:$0xf]
    %v302 = vld [vmem:[%s3 + $0x80] sm:$0xf]
    %v303 = vld [vmem:[%s3 + $0x84] sm:$0xf]
    %v304 = vld [vmem:[%s3 + $0x88] sm:$0xf]
    %v305 = vld [vmem:[%s3 + $0x8c] sm:$0xf]
    %v306 = vld [vmem:[%s3 + $0x90] sm:$0xf]
    %v307 = vld [vmem:[%s3 + $0x94] sm:$0xf]
    %v308 = vld [vmem:[%s3 + $0x98] sm:$0xf]
    %v309 = vld [vmem:[%s3 + $0x9c] sm:$0xf]
    %v310 = vld [vmem:[%s3 + $0xa0] sm:$0xf]
    %v311 = vld [vmem:[%s3 + $0xa4] sm:$0xf]
    %v312 = vld [vmem:[%s3 + $0xa8] sm:$0xf]
    %v313 = vld [vmem:[%s3 + $0xac] sm:$0xf]
    %v314 = vld [vmem:[%s3 + $0xb0] sm:$0xf]
    %v315 = vld [vmem:[%s3 + $0xb4] sm:$0xf]
    %v316 = vld [vmem:[%s3 + $0xb8] sm:$0xf]
    %v317 = vld [vmem:[%s3 + $0xbc] sm:$0xf]
    %v318 = vld [vmem:[%s3 + $0xc0] sm:$0xf]
    %v319 = vld [vmem:[%s3 + $0xc4] sm:$0xf]
    %v320 = vld [vmem:[%s3 + $0xc8] sm:$0xf]
    %v321 = vld [vmem:[%s3 + $0xcc] sm:$0xf]
    %v322 = vld [vmem:[%s3 + $0xd0] sm:$0xf]
    %v323 = vld [vmem:[%s3 + $0xd4] sm:$0xf]
    %v324 = vld [vmem:[%s3 + $0xd8] sm:$0xf]
    %v325 = vld [vmem:[%s3 + $0xdc] sm:$0xf]
    %v326 = vld [vmem:[%s3 + $0xe0] sm:$0xf]
    %v327 = vld [vmem:[%s3 + $0xe4] sm:$0xf]
    %v328 = vld [vmem:[%s3 + $0xe8] sm:$0xf]
    %v329 = vld [vmem:[%s3 + $0xec] sm:$0xf]
    %v330 = vld [vmem:[%s3 + $0xf0] sm:$0xf]
    %v331 = vld [vmem:[%s3 + $0xf4] sm:$0xf]
    %v332 = vld [vmem:[%s3 + $0xf8] sm:$0xf]
    %v333 = vld [vmem:[%s3 + $0xfc] sm:$0xf]
    %v398 = vunpack.c.l.b16 %v270
    %v399 = vunpack.c.l.b16 %v271
    %v400 = vunpack.c.l.b16 %v272
    %v401 = vunpack.c.l.b16 %v273
    %v402 = vunpack.c.l.b16 %v274
    %v403 = vunpack.c.l.b16 %v275
    %v404 = vunpack.c.l.b16 %v276
    %v405 = vunpack.c.l.b16 %v277
    %v406 = vunpack.c.l.b16 %v278
    %v407 = vunpack.c.l.b16 %v279
    %v408 = vunpack.c.l.b16 %v280
    %v409 = vunpack.c.l.b16 %v281
    %v410 = vunpack.c.l.b16 %v282
    %v411 = vunpack.c.l.b16 %v283
    %v412 = vunpack.c.l.b16 %v284
    %v413 = vunpack.c.l.b16 %v285
    %v414 = vunpack.c.l.b16 %v286
    %v415 = vunpack.c.l.b16 %v287
    %v416 = vunpack.c.l.b16 %v288
    %v417 = vunpack.c.l.b16 %v289
    %v418 = vunpack.c.l.b16 %v290
    %v419 = vunpack.c.l.b16 %v291
    %v420 = vunpack.c.l.b16 %v292
    %v421 = vunpack.c.l.b16 %v293
    %v422 = vunpack.c.l.b16 %v294
    %v423 = vunpack.c.l.b16 %v295
    %v424 = vunpack.c.l.b16 %v296
    %v425 = vunpack.c.l.b16 %v297
    %v426 = vunpack.c.l.b16 %v298
    %v427 = vunpack.c.l.b16 %v299
    %v428 = vunpack.c.l.b16 %v300
    %v429 = vunpack.c.l.b16 %v301
    %v430 = vunpack.c.l.b16 %v302
    %v431 = vunpack.c.l.b16 %v303
    %v432 = vunpack.c.l.b16 %v304
    %v433 = vunpack.c.l.b16 %v305
    %v434 = vunpack.c.l.b16 %v306
    %v435 = vunpack.c.l.b16 %v307
    %v436 = vunpack.c.l.b16 %v308
    %v437 = vunpack.c.l.b16 %v309
    %v438 = vunpack.c.l.b16 %v310
    %v439 = vunpack.c.l.b16 %v311
    %v440 = vunpack.c.l.b16 %v312
    %v441 = vunpack.c.l.b16 %v313
    %v442 = vunpack.c.l.b16 %v314
    %v443 = vunpack.c.l.b16 %v315
    %v444 = vunpack.c.l.b16 %v316
    %v445 = vunpack.c.l.b16 %v317
    %v446 = vunpack.c.l.b16 %v318
    %v447 = vunpack.c.l.b16 %v319
    %v448 = vunpack.c.l.b16 %v320
    %v449 = vunpack.c.l.b16 %v321
    %v450 = vunpack.c.l.b16 %v322
    %v451 = vunpack.c.l.b16 %v323
    %v452 = vunpack.c.l.b16 %v324
    %v453 = vunpack.c.l.b16 %v325
    %v454 = vunpack.c.l.b16 %v326
    %v455 = vunpack.c.l.b16 %v327
    %v456 = vunpack.c.l.b16 %v328
    %v457 = vunpack.c.l.b16 %v329
    %v458 = vunpack.c.l.b16 %v330
    %v459 = vunpack.c.l.b16 %v331
    %v460 = vunpack.c.l.b16 %v332
    %v461 = vunpack.c.l.b16 %v333
    %v462 = vpack.c.b16 %v399, %v398
    %v463 = vpack.c.b16 %v401, %v400
    %v464 = vpack.c.b16 %v403, %v402
    %v465 = vpack.c.b16 %v405, %v404
    %v466 = vpack.c.b16 %v407, %v406
    %v467 = vpack.c.b16 %v409, %v408
    %v468 = vpack.c.b16 %v411, %v410
    %v469 = vpack.c.b16 %v413, %v412
    %v470 = vpack.c.b16 %v415, %v414
    %v471 = vpack.c.b16 %v417, %v416
    %v472 = vpack.c.b16 %v419, %v418
    %v473 = vpack.c.b16 %v421, %v420
    %v474 = vpack.c.b16 %v423, %v422
    %v475 = vpack.c.b16 %v425, %v424
    %v476 = vpack.c.b16 %v427, %v426
    %v477 = vpack.c.b16 %v429, %v428
    %v478 = vpack.c.b16 %v431, %v430
    %v479 = vpack.c.b16 %v433, %v432
    %v480 = vpack.c.b16 %v435, %v434
    %v481 = vpack.c.b16 %v437, %v436
    %v482 = vpack.c.b16 %v439, %v438
    %v483 = vpack.c.b16 %v441, %v440
    %v484 = vpack.c.b16 %v443, %v442
    %v485 = vpack.c.b16 %v445, %v444
    %v486 = vpack.c.b16 %v447, %v446
    %v487 = vpack.c.b16 %v449, %v448
    %v488 = vpack.c.b16 %v451, %v450
    %v489 = vpack.c.b16 %v453, %v452
    %v490 = vpack.c.b16 %v455, %v454
    %v491 = vpack.c.b16 %v457, %v456
    %v492 = vpack.c.b16 %v459, %v458
    %v493 = vpack.c.b16 %v461, %v460
    %526 = vmatprep.subr.bf16.mxu0 0
    %527 = vmatpush1.bf16.msra.mxu0 %v469
    %528 = vmatprep.subr.bf16.mxu0 0
    %529 = vmatpush1.bf16.msra.mxu0 %v468
    %530 = vmatprep.subr.bf16.mxu0 0
    %531 = vmatpush1.bf16.msra.mxu0 %v467
    %532 = vmatprep.subr.bf16.mxu0 0
    %533 = vmatpush1.bf16.msra.mxu0 %v466
    %534 = vmatprep.subr.bf16.mxu0 0
    %535 = vmatpush1.bf16.msra.mxu0 %v465
    %536 = vmatprep.subr.bf16.mxu0 0
    %537 = vmatpush1.bf16.msra.mxu0 %v464
    %538 = vmatprep.subr.bf16.mxu0 0
    %539 = vmatpush1.bf16.msra.mxu0 %v463
    %540 = vmatprep.subr.bf16.mxu0 0
    %541 = vmatpush1.bf16.msra.mxu0 %v462
    %542 = vmatprep.subr.bf16.mxu0 0
    %543 = vmatpush2.bf16.msra.mxu0 %v477
    %544 = vmatprep.subr.bf16.mxu0 0
    %545 = vmatpush2.bf16.msra.mxu0 %v476
    %546 = vmatprep.subr.bf16.mxu0 0
    %547 = vmatpush2.bf16.msra.mxu0 %v475
    %548 = vmatprep.subr.bf16.mxu0 0
    %549 = vmatpush2.bf16.msra.mxu0 %v474
    %550 = vmatprep.subr.bf16.mxu0 0
    %551 = vmatpush2.bf16.msra.mxu0 %v473
    %552 = vmatprep.subr.bf16.mxu0 0
    %553 = vmatpush2.bf16.msra.mxu0 %v472
    %554 = vmatprep.subr.bf16.mxu0 0
    %555 = vmatpush2.bf16.msra.mxu0 %v471
    %556 = vmatprep.subr.bf16.mxu0 0
    %557 = vmatpush2.bf16.msra.mxu0 %v470
    %558 = vmatprep.mubr.bf16.mxu0 %v267
    %559 = vmatmul.mubr.bf16.gmra.mxu0 %v266
    %v560 = vpop.f32.mrf.mxu0
    %v561 = vadd.f32 0.0, %v560
    %v562 = vpop.f32.mrf.mxu0
    %v563 = vpop.f32.mrf.mxu0
    %v564 = vpop.f32.mrf.mxu0
    %565 = vdwg.mxu0
    %566 = vmatprep.subr.bf16.mxu0 0
    %567 = vmatpush1.bf16.msra.mxu0 %v485
    %568 = vmatprep.subr.bf16.mxu0 0
    %569 = vmatpush1.bf16.msra.mxu0 %v484
    %570 = vmatprep.subr.bf16.mxu0 0
    %571 = vmatpush1.bf16.msra.mxu0 %v483
    %572 = vmatprep.subr.bf16.mxu0 0
    %573 = vmatpush1.bf16.msra.mxu0 %v482
    %574 = vmatprep.subr.bf16.mxu0 0
    %575 = vmatpush1.bf16.msra.mxu0 %v481
    %576 = vmatprep.subr.bf16.mxu0 0
    %577 = vmatpush1.bf16.msra.mxu0 %v480
    %578 = vmatprep.subr.bf16.mxu0 0
    %579 = vmatpush1.bf16.msra.mxu0 %v479
    %580 = vmatprep.subr.bf16.mxu0 0
    %581 = vmatpush1.bf16.msra.mxu0 %v478
    %582 = vmatprep.subr.bf16.mxu0 0
    %583 = vmatpush2.bf16.msra.mxu0 %v493
    %584 = vmatprep.subr.bf16.mxu0 0
    %585 = vmatpush2.bf16.msra.mxu0 %v492
    %586 = vmatprep.subr.bf16.mxu0 0
    %587 = vmatpush2.bf16.msra.mxu0 %v491
    %588 = vmatprep.subr.bf16.mxu0 0
    %589 = vmatpush2.bf16.msra.mxu0 %v490
    %590 = vmatprep.subr.bf16.mxu0 0
    %591 = vmatpush2.bf16.msra.mxu0 %v489
    %592 = vmatprep.subr.bf16.mxu0 0
    %593 = vmatpush2.bf16.msra.mxu0 %v488
    %594 = vmatprep.subr.bf16.mxu0 0
    %595 = vmatpush2.bf16.msra.mxu0 %v487
    %596 = vmatprep.subr.bf16.mxu0 0
    %597 = vmatpush2.bf16.msra.mxu0 %v486
    %598 = vmatprep.mubr.bf16.mxu0 %v269
    %599 = vmatmul.mubr.bf16.gmra.mxu0 %v268
    %v600 = vpop.f32.mrf.mxu0
    %v601 = vadd.f32 %v561, %v600
    %v602 = vpop.f32.mrf.mxu0
    %v603 = vpop.f32.mrf.mxu0
    %v604 = vpop.f32.mrf.mxu0
    %605 = vdwg.mxu0
    %v606 = vmul.bf16 %v266, %v266
    %v607 = vmul.bf16 %v267, %v267
    %v608 = vmul.bf16 %v268, %v268
    %v609 = vmul.bf16 %v269, %v269
    %610 = vmatprep.subr.bf16.mxu0 0
    %611 = vmatpush1.bf16.msra.mxu0 %v469
    %612 = vmatprep.subr.bf16.mxu0 0
    %613 = vmatpush1.bf16.msra.mxu0 %v468
    %614 = vmatprep.subr.bf16.mxu0 0
    %615 = vmatpush1.bf16.msra.mxu0 %v467
    %616 = vmatprep.subr.bf16.mxu0 0
    %617 = vmatpush1.bf16.msra.mxu0 %v466
    %618 = vmatprep.subr.bf16.mxu0 0
    %619 = vmatpush1.bf16.msra.mxu0 %v465
    %620 = vmatprep.subr.bf16.mxu0 0
    %621 = vmatpush1.bf16.msra.mxu0 %v464
    %622 = vmatprep.subr.bf16.mxu0 0
    %623 = vmatpush1.bf16.msra.mxu0 %v463
    %624 = vmatprep.subr.bf16.mxu0 0
    %625 = vmatpush1.bf16.msra.mxu0 %v462
    %626 = vmatprep.subr.bf16.mxu0 0
    %627 = vmatpush2.bf16.msra.mxu0 %v477
    %628 = vmatprep.subr.bf16.mxu0 0
    %629 = vmatpush2.bf16.msra.mxu0 %v476
    %630 = vmatprep.subr.bf16.mxu0 0
    %631 = vmatpush2.bf16.msra.mxu0 %v475
    %632 = vmatprep.subr.bf16.mxu0 0
    %633 = vmatpush2.bf16.msra.mxu0 %v474
    %634 = vmatprep.subr.bf16.mxu0 0
    %635 = vmatpush2.bf16.msra.mxu0 %v473
    %636 = vmatprep.subr.bf16.mxu0 0
    %637 = vmatpush2.bf16.msra.mxu0 %v472
    %638 = vmatprep.subr.bf16.mxu0 0
    %639 = vmatpush2.bf16.msra.mxu0 %v471
    %640 = vmatprep.subr.bf16.mxu0 0
    %641 = vmatpush2.bf16.msra.mxu0 %v470
    %642 = vmatprep.mubr.bf16.mxu0 %v607
    %643 = vmatmul.mubr.bf16.gmra.mxu0 %v606
    %v644 = vpop.f32.mrf.mxu0
    %v645 = vadd.f32 0.0, %v644
    %v646 = vpop.f32.mrf.mxu0
    %v647 = vpop.f32.mrf.mxu0
    %v648 = vpop.f32.mrf.mxu0
    %649 = vdwg.mxu0
    %650 = vmatprep.subr.bf16.mxu0 0
    %651 = vmatpush1.bf16.msra.mxu0 %v485
    %652 = vmatprep.subr.bf16.mxu0 0
    %653 = vmatpush1.bf16.msra.mxu0 %v484
    %654 = vmatprep.subr.bf16.mxu0 0
    %655 = vmatpush1.bf16.msra.mxu0 %v483
    %656 = vmatprep.subr.bf16.mxu0 0
    %657 = vmatpush1.bf16.msra.mxu0 %v482
    %658 = vmatprep.subr.bf16.mxu0 0
    %659 = vmatpush1.bf16.msra.mxu0 %v481
    %660 = vmatprep.subr.bf16.mxu0 0
    %661 = vmatpush1.bf16.msra.mxu0 %v480
    %662 = vmatprep.subr.bf16.mxu0 0
    %663 = vmatpush1.bf16.msra.mxu0 %v479
    %664 = vmatprep.subr.bf16.mxu0 0
    %665 = vmatpush1.bf16.msra.mxu0 %v478
    %666 = vmatprep.subr.bf16.mxu0 0
    %667 = vmatpush2.bf16.msra.mxu0 %v493
    %668 = vmatprep.subr.bf16.mxu0 0
    %669 = vmatpush2.bf16.msra.mxu0 %v492
    %670 = vmatprep.subr.bf16.mxu0 0
    %671 = vmatpush2.bf16.msra.mxu0 %v491
    %672 = vmatprep.subr.bf16.mxu0 0
    %673 = vmatpush2.bf16.msra.mxu0 %v490
    %674 = vmatprep.subr.bf16.mxu0 0
    %675 = vmatpush2.bf16.msra.mxu0 %v489
    %676 = vmatprep.subr.bf16.mxu0 0
    %677 = vmatpush2.bf16.msra.mxu0 %v488
    %678 = vmatprep.subr.bf16.mxu0 0
    %679 = vmatpush2.bf16.msra.mxu0 %v487
    %680 = vmatprep.subr.bf16.mxu0 0
    %681 = vmatpush2.bf16.msra.mxu0 %v486
    %682 = vmatprep.mubr.bf16.mxu0 %v609
    %683 = vmatmul.mubr.bf16.gmra.mxu0 %v608
    %v684 = vpop.f32.mrf.mxu0
    %v685 = vadd.f32 %v645, %v684
    %v686 = vpop.f32.mrf.mxu0
    %v687 = vpop.f32.mrf.mxu0
    %v688 = vpop.f32.mrf.mxu0
    %689 = vdwg.mxu0
    %v690 = vld [vmem:[%s4] sm:$0x1]
    %v692 = vlaneseq
    %v693 = vshrl.u32 %v692, 7
    %v694 = vsub.s32 0, %v693
    %v695 = vrot.slane %v690, %v694
    %v697 = vmul.f32 %v601, %v695
    %v698 = vmul.f32 %v685, %v695
    %v699 = vmul.f32 %v697, %v697
    %v700 = vsub.f32 %v698, %v699
    %v701 = vmax.f32 %v700, 0.0
    %v702 = vadd.f32 %v701, 1e-05
    %v703 = vrsqrt.pop %v702
    %v704 = vpack.c.bf16 %v703, %v703
    %v705 = vld [vmem:[%s5] sm:$0xff]
    %v706 = vld [vmem:[%s5 + $0x8] sm:$0xff]
    %v709 = vunpack.c.l.b16 %v705
    %v710 = vunpack.c.h.b16 %v705
    %v711 = vunpack.c.l.b16 %v706
    %v712 = vunpack.c.h.b16 %v706
    %v713 = vpack.c.b16 %v709, %v709
    %v714 = vpack.c.b16 %v710, %v710
    %v715 = vpack.c.b16 %v711, %v711
    %v716 = vpack.c.b16 %v712, %v712
    %vm717 = vcmask 64512
    %v719 = vsel %vm717, %v704, 0
    %vm721 = vcmask 1043456
    %v723 = vsel %vm721, %v713, 0
    %v726 = vsel %vm721, %v714, 0
    %v729 = vsel %vm721, %v715, 0
    %v732 = vsel %vm721, %v716, 0
    %734 = vmatprep.subr.bf16.mxu0 0
    %735 = vmatpush1.bf16.msra.mxu0 0
    %736 = vmatprep.subr.bf16.mxu0 0
    %737 = vmatpush1.bf16.msra.mxu0 0
    %738 = vmatprep.subr.bf16.mxu0 0
    %739 = vmatpush1.bf16.msra.mxu0 0
    %740 = vmatprep.subr.bf16.mxu0 0
    %741 = vmatpush1.bf16.msra.mxu0 0
    %742 = vmatprep.subr.bf16.mxu0 0
    %743 = vmatpush1.bf16.msra.mxu0 0
    %744 = vmatprep.subr.bf16.mxu0 0
    %745 = vmatpush1.bf16.msra.mxu0 0
    %746 = vmatprep.subr.bf16.mxu0 0
    %747 = vmatpush1.bf16.msra.mxu0 0
    %748 = vmatprep.subr.bf16.mxu0 %v726
    %749 = vmatpush1.bf16.msra.mxu0 %v723
    %750 = vmatprep.subr.bf16.mxu0 0
    %751 = vmatpush2.bf16.msra.mxu0 0
    %752 = vmatprep.subr.bf16.mxu0 0
    %753 = vmatpush2.bf16.msra.mxu0 0
    %754 = vmatprep.subr.bf16.mxu0 0
    %755 = vmatpush2.bf16.msra.mxu0 0
    %756 = vmatprep.subr.bf16.mxu0 0
    %757 = vmatpush2.bf16.msra.mxu0 0
    %758 = vmatprep.subr.bf16.mxu0 0
    %759 = vmatpush2.bf16.msra.mxu0 0
    %760 = vmatprep.subr.bf16.mxu0 0
    %761 = vmatpush2.bf16.msra.mxu0 0
    %762 = vmatprep.subr.bf16.mxu0 0
    %763 = vmatpush2.bf16.msra.mxu0 0
    %764 = vmatprep.subr.bf16.mxu0 0
    %765 = vmatpush2.bf16.msra.mxu0 0
    %766 = vmatprep.mubr.bf16.mxu0 0
    %767 = vmatmul.mubr.bf16.gmra.mxu0 %v719
    %v768 = vpop.f32.mrf.mxu0
    %v769 = vadd.f32 0.0, %v768
    %v770 = vpop.f32.mrf.mxu0
    %v771 = vadd.f32 0.0, %v770
    %v772 = vpop.f32.mrf.mxu0
    %v773 = vpop.f32.mrf.mxu0
    %774 = vdwg.mxu0
    %775 = vmatprep.subr.bf16.mxu0 0
    %776 = vmatpush1.bf16.msra.mxu0 0
    %777 = vmatprep.subr.bf16.mxu0 0
    %778 = vmatpush1.bf16.msra.mxu0 0
    %779 = vmatprep.subr.bf16.mxu0 0
    %780 = vmatpush1.bf16.msra.mxu0 0
    %781 = vmatprep.subr.bf16.mxu0 0
    %782 = vmatpush1.bf16.msra.mxu0 0
    %783 = vmatprep.subr.bf16.mxu0 0
    %784 = vmatpush1.bf16.msra.mxu0 0
    %785 = vmatprep.subr.bf16.mxu0 0
    %786 = vmatpush1.bf16.msra.mxu0 0
    %787 = vmatprep.subr.bf16.mxu0 0
    %788 = vmatpush1.bf16.msra.mxu0 0
    %789 = vmatprep.subr.bf16.mxu0 %v732
    %790 = vmatpush1.bf16.msra.mxu0 %v729
    %791 = vmatprep.subr.bf16.mxu0 0
    %792 = vmatpush2.bf16.msra.mxu0 0
    %793 = vmatprep.subr.bf16.mxu0 0
    %794 = vmatpush2.bf16.msra.mxu0 0
    %795 = vmatprep.subr.bf16.mxu0 0
    %796 = vmatpush2.bf16.msra.mxu0 0
    %797 = vmatprep.subr.bf16.mxu0 0
    %798 = vmatpush2.bf16.msra.mxu0 0
    %799 = vmatprep.subr.bf16.mxu0 0
    %800 = vmatpush2.bf16.msra.mxu0 0
    %801 = vmatprep.subr.bf16.mxu0 0
    %802 = vmatpush2.bf16.msra.mxu0 0
    %803 = vmatprep.subr.bf16.mxu0 0
    %804 = vmatpush2.bf16.msra.mxu0 0
    %805 = vmatprep.subr.bf16.mxu0 0
    %806 = vmatpush2.bf16.msra.mxu0 0
    %807 = vmatprep.mubr.bf16.mxu0 0
    %808 = vmatmul.mubr.bf16.gmra.mxu0 %v719
    %v809 = vpop.f32.mrf.mxu0
    %v810 = vadd.f32 0.0, %v809
    %v811 = vpop.f32.mrf.mxu0
    %v812 = vadd.f32 0.0, %v811
    %v813 = vpop.f32.mrf.mxu0
    %v814 = vpop.f32.mrf.mxu0
    %815 = vdwg.mxu0
    %v816 = vmul.f32 %v697, %v703
    %v817 = vpack.c.bf16 %v816, %v816
    %v819 = vsel %vm717, %v817, 0
    %821 = vmatprep.subr.bf16.mxu0 0
    %822 = vmatpush1.bf16.msra.mxu0 0
    %823 = vmatprep.subr.bf16.mxu0 0
    %824 = vmatpush1.bf16.msra.mxu0 0
    %825 = vmatprep.subr.bf16.mxu0 0
    %826 = vmatpush1.bf16.msra.mxu0 0
    %827 = vmatprep.subr.bf16.mxu0 0
    %828 = vmatpush1.bf16.msra.mxu0 0
    %829 = vmatprep.subr.bf16.mxu0 0
    %830 = vmatpush1.bf16.msra.mxu0 0
    %831 = vmatprep.subr.bf16.mxu0 0
    %832 = vmatpush1.bf16.msra.mxu0 0
    %833 = vmatprep.subr.bf16.mxu0 0
    %834 = vmatpush1.bf16.msra.mxu0 0
    %835 = vmatprep.subr.bf16.mxu0 %v726
    %836 = vmatpush1.bf16.msra.mxu0 %v723
    %837 = vmatprep.subr.bf16.mxu0 0
    %838 = vmatpush2.bf16.msra.mxu0 0
    %839 = vmatprep.subr.bf16.mxu0 0
    %840 = vmatpush2.bf16.msra.mxu0 0
    %841 = vmatprep.subr.bf16.mxu0 0
    %842 = vmatpush2.bf16.msra.mxu0 0
    %843 = vmatprep.subr.bf16.mxu0 0
    %844 = vmatpush2.bf16.msra.mxu0 0
    %845 = vmatprep.subr.bf16.mxu0 0
    %846 = vmatpush2.bf16.msra.mxu0 0
    %847 = vmatprep.subr.bf16.mxu0 0
    %848 = vmatpush2.bf16.msra.mxu0 0
    %849 = vmatprep.subr.bf16.mxu0 0
    %850 = vmatpush2.bf16.msra.mxu0 0
    %851 = vmatprep.subr.bf16.mxu0 0
    %852 = vmatpush2.bf16.msra.mxu0 0
    %853 = vmatprep.mubr.bf16.mxu0 0
    %854 = vmatmul.mubr.bf16.gmra.mxu0 %v819
    %v855 = vpop.f32.mrf.mxu0
    %v856 = vadd.f32 0.0, %v855
    %v857 = vpop.f32.mrf.mxu0
    %v858 = vadd.f32 0.0, %v857
    %v859 = vpop.f32.mrf.mxu0
    %v860 = vpop.f32.mrf.mxu0
    %861 = vdwg.mxu0
    %862 = vmatprep.subr.bf16.mxu0 0
    %863 = vmatpush1.bf16.msra.mxu0 0
    %864 = vmatprep.subr.bf16.mxu0 0
    %865 = vmatpush1.bf16.msra.mxu0 0
    %866 = vmatprep.subr.bf16.mxu0 0
    %867 = vmatpush1.bf16.msra.mxu0 0
    %868 = vmatprep.subr.bf16.mxu0 0
    %869 = vmatpush1.bf16.msra.mxu0 0
    %870 = vmatprep.subr.bf16.mxu0 0
    %871 = vmatpush1.bf16.msra.mxu0 0
    %872 = vmatprep.subr.bf16.mxu0 0
    %873 = vmatpush1.bf16.msra.mxu0 0
    %874 = vmatprep.subr.bf16.mxu0 0
    %875 = vmatpush1.bf16.msra.mxu0 0
    %876 = vmatprep.subr.bf16.mxu0 %v732
    %877 = vmatpush1.bf16.msra.mxu0 %v729
    %878 = vmatprep.subr.bf16.mxu0 0
    %879 = vmatpush2.bf16.msra.mxu0 0
    %880 = vmatprep.subr.bf16.mxu0 0
    %881 = vmatpush2.bf16.msra.mxu0 0
    %882 = vmatprep.subr.bf16.mxu0 0
    %883 = vmatpush2.bf16.msra.mxu0 0
    %884 = vmatprep.subr.bf16.mxu0 0
    %885 = vmatpush2.bf16.msra.mxu0 0
    %886 = vmatprep.subr.bf16.mxu0 0
    %887 = vmatpush2.bf16.msra.mxu0 0
    %888 = vmatprep.subr.bf16.mxu0 0
    %889 = vmatpush2.bf16.msra.mxu0 0
    %890 = vmatprep.subr.bf16.mxu0 0
    %891 = vmatpush2.bf16.msra.mxu0 0
    %892 = vmatprep.subr.bf16.mxu0 0
    %893 = vmatpush2.bf16.msra.mxu0 0
    %894 = vmatprep.mubr.bf16.mxu0 0
    %895 = vmatmul.mubr.bf16.gmra.mxu0 %v819
    %v896 = vpop.f32.mrf.mxu0
    %v897 = vadd.f32 0.0, %v896
    %v898 = vpop.f32.mrf.mxu0
    %v899 = vadd.f32 0.0, %v898
    %v900 = vpop.f32.mrf.mxu0
    %v901 = vpop.f32.mrf.mxu0
    %902 = vdwg.mxu0
    %v903 = vmul.f32 %v219, %v769
    %v904 = vmul.f32 %v221, %v771
    %v905 = vmul.f32 %v260, %v810
    %v906 = vmul.f32 %v262, %v812
    %v907 = vsub.f32 %v903, %v856
    %v908 = vsub.f32 %v904, %v858
    %v909 = vsub.f32 %v905, %v897
    %v910 = vsub.f32 %v906, %v899
    %v911 = vld [vmem:[%s6] sm:$0xf]
    %v913 = vlaneseq
    %v914 = vshrl.u32 %v913, 7
    %v915 = vsub.s32 0, %v914
    %v916 = vrot.slane %v911, %v915
    %v917 = vlaneseq
    %v918 = vshrl.u32 %v917, 7
    %v919 = vsub.s32 1, %v918
    %v920 = vrot.slane %v911, %v919
    %v921 = vlaneseq
    %v922 = vshrl.u32 %v921, 7
    %v923 = vsub.s32 2, %v922
    %v924 = vrot.slane %v911, %v923
    %v925 = vlaneseq
    %v926 = vshrl.u32 %v925, 7
    %v927 = vsub.s32 3, %v926
    %v928 = vrot.slane %v911, %v927
    %v933 = vadd.f32 %v907, %v916
    %v934 = vadd.f32 %v908, %v920
    %v935 = vadd.f32 %v909, %v924
    %v936 = vadd.f32 %v910, %v928
    %v937 = vmax.f32 %v933, 0.0
    %v938 = vmax.f32 %v934, 0.0
    %v939 = vmax.f32 %v935, 0.0
    %v940 = vmax.f32 %v936, 0.0
    %v941 = vpack.c.bf16 %v937, %v937
    %v942 = vpack.c.bf16 %v938, %v938
    %v943 = vpack.c.bf16 %v939, %v939
    %v944 = vpack.c.bf16 %v940, %v940
    %v945 = vld [vmem:[#allocation3] sm:$0xff]
    %v946 = vld [vmem:[#allocation3 + $0x8] sm:$0xff]
    %v947 = vld [vmem:[#allocation3 + $0x10] sm:$0xff]
    %v948 = vld [vmem:[#allocation3 + $0x18] sm:$0xff]
    %v949 = vld [vmem:[#allocation3 + $0x20] sm:$0xff]
    %v950 = vld [vmem:[#allocation3 + $0x28] sm:$0xff]
    %v951 = vld [vmem:[#allocation3 + $0x30] sm:$0xff]
    %v952 = vld [vmem:[#allocation3 + $0x38] sm:$0xff]
    %v953 = vld [vmem:[#allocation3 + $0x40] sm:$0xff]
    %v954 = vld [vmem:[#allocation3 + $0x48] sm:$0xff]
    %v955 = vld [vmem:[#allocation3 + $0x50] sm:$0xff]
    %v956 = vld [vmem:[#allocation3 + $0x58] sm:$0xff]
    %v957 = vld [vmem:[#allocation3 + $0x60] sm:$0xff]
    %v958 = vld [vmem:[#allocation3 + $0x68] sm:$0xff]
    %v959 = vld [vmem:[#allocation3 + $0x70] sm:$0xff]
    %v960 = vld [vmem:[#allocation3 + $0x78] sm:$0xff]
    %v961 = vld [vmem:[#allocation3 + $0x80] sm:$0xff]
    %v962 = vld [vmem:[#allocation3 + $0x88] sm:$0xff]
    %v963 = vld [vmem:[#allocation3 + $0x90] sm:$0xff]
    %v964 = vld [vmem:[#allocation3 + $0x98] sm:$0xff]
    %v965 = vld [vmem:[#allocation3 + $0xa0] sm:$0xff]
    %v966 = vld [vmem:[#allocation3 + $0xa8] sm:$0xff]
    %v967 = vld [vmem:[#allocation3 + $0xb0] sm:$0xff]
    %v968 = vld [vmem:[#allocation3 + $0xb8] sm:$0xff]
    %v969 = vld [vmem:[#allocation3 + $0xc0] sm:$0xff]
    %v970 = vld [vmem:[#allocation3 + $0xc8] sm:$0xff]
    %v971 = vld [vmem:[#allocation3 + $0xd0] sm:$0xff]
    %v972 = vld [vmem:[#allocation3 + $0xd8] sm:$0xff]
    %v973 = vld [vmem:[#allocation3 + $0xe0] sm:$0xff]
    %v974 = vld [vmem:[#allocation3 + $0xe8] sm:$0xff]
    %v975 = vld [vmem:[#allocation3 + $0xf0] sm:$0xff]
    %v976 = vld [vmem:[#allocation3 + $0xf8] sm:$0xff]
    %v977 = vld [vmem:[#allocation3 + $0x100] sm:$0xff]
    %v978 = vld [vmem:[#allocation3 + $0x108] sm:$0xff]
    %v979 = vld [vmem:[#allocation3 + $0x110] sm:$0xff]
    %v980 = vld [vmem:[#allocation3 + $0x118] sm:$0xff]
    %v981 = vld [vmem:[#allocation3 + $0x120] sm:$0xff]
    %v982 = vld [vmem:[#allocation3 + $0x128] sm:$0xff]
    %v983 = vld [vmem:[#allocation3 + $0x130] sm:$0xff]
    %v984 = vld [vmem:[#allocation3 + $0x138] sm:$0xff]
    %v985 = vld [vmem:[#allocation3 + $0x140] sm:$0xff]
    %v986 = vld [vmem:[#allocation3 + $0x148] sm:$0xff]
    %v987 = vld [vmem:[#allocation3 + $0x150] sm:$0xff]
    %v988 = vld [vmem:[#allocation3 + $0x158] sm:$0xff]
    %v989 = vld [vmem:[#allocation3 + $0x160] sm:$0xff]
    %v990 = vld [vmem:[#allocation3 + $0x168] sm:$0xff]
    %v991 = vld [vmem:[#allocation3 + $0x170] sm:$0xff]
    %v992 = vld [vmem:[#allocation3 + $0x178] sm:$0xff]
    %v993 = vld [vmem:[#allocation3 + $0x180] sm:$0xff]
    %v994 = vld [vmem:[#allocation3 + $0x188] sm:$0xff]
    %v995 = vld [vmem:[#allocation3 + $0x190] sm:$0xff]
    %v996 = vld [vmem:[#allocation3 + $0x198] sm:$0xff]
    %v997 = vld [vmem:[#allocation3 + $0x1a0] sm:$0xff]
    %v998 = vld [vmem:[#allocation3 + $0x1a8] sm:$0xff]
    %v999 = vld [vmem:[#allocation3 + $0x1b0] sm:$0xff]
    %v1000 = vld [vmem:[#allocation3 + $0x1b8] sm:$0xff]
    %v1001 = vld [vmem:[#allocation3 + $0x1c0] sm:$0xff]
    %v1002 = vld [vmem:[#allocation3 + $0x1c8] sm:$0xff]
    %v1003 = vld [vmem:[#allocation3 + $0x1d0] sm:$0xff]
    %v1004 = vld [vmem:[#allocation3 + $0x1d8] sm:$0xff]
    %v1005 = vld [vmem:[#allocation3 + $0x1e0] sm:$0xff]
    %v1006 = vld [vmem:[#allocation3 + $0x1e8] sm:$0xff]
    %v1007 = vld [vmem:[#allocation3 + $0x1f0] sm:$0xff]
    %v1008 = vld [vmem:[#allocation3 + $0x1f8] sm:$0xff]
    %v1009 = vld [vmem:[#allocation3 + $0x200] sm:$0xff]
    %v1010 = vld [vmem:[#allocation3 + $0x208] sm:$0xff]
    %v1011 = vld [vmem:[#allocation3 + $0x210] sm:$0xff]
    %v1012 = vld [vmem:[#allocation3 + $0x218] sm:$0xff]
    %v1013 = vld [vmem:[#allocation3 + $0x220] sm:$0xff]
    %v1014 = vld [vmem:[#allocation3 + $0x228] sm:$0xff]
    %v1015 = vld [vmem:[#allocation3 + $0x230] sm:$0xff]
    %v1016 = vld [vmem:[#allocation3 + $0x238] sm:$0xff]
    %v1017 = vld [vmem:[#allocation3 + $0x240] sm:$0xff]
    %v1018 = vld [vmem:[#allocation3 + $0x248] sm:$0xff]
    %v1019 = vld [vmem:[#allocation3 + $0x250] sm:$0xff]
    %v1020 = vld [vmem:[#allocation3 + $0x258] sm:$0xff]
    %v1021 = vld [vmem:[#allocation3 + $0x260] sm:$0xff]
    %v1022 = vld [vmem:[#allocation3 + $0x268] sm:$0xff]
    %v1023 = vld [vmem:[#allocation3 + $0x270] sm:$0xff]
    %v1024 = vld [vmem:[#allocation3 + $0x278] sm:$0xff]
    %v1025 = vld [vmem:[#allocation3 + $0x280] sm:$0xff]
    %v1026 = vld [vmem:[#allocation3 + $0x288] sm:$0xff]
    %v1027 = vld [vmem:[#allocation3 + $0x290] sm:$0xff]
    %v1028 = vld [vmem:[#allocation3 + $0x298] sm:$0xff]
    %v1029 = vld [vmem:[#allocation3 + $0x2a0] sm:$0xff]
    %v1030 = vld [vmem:[#allocation3 + $0x2a8] sm:$0xff]
    %v1031 = vld [vmem:[#allocation3 + $0x2b0] sm:$0xff]
    %v1032 = vld [vmem:[#allocation3 + $0x2b8] sm:$0xff]
    %v1033 = vld [vmem:[#allocation3 + $0x2c0] sm:$0xff]
    %v1034 = vld [vmem:[#allocation3 + $0x2c8] sm:$0xff]
    %v1035 = vld [vmem:[#allocation3 + $0x2d0] sm:$0xff]
    %v1036 = vld [vmem:[#allocation3 + $0x2d8] sm:$0xff]
    %v1037 = vld [vmem:[#allocation3 + $0x2e0] sm:$0xff]
    %v1038 = vld [vmem:[#allocation3 + $0x2e8] sm:$0xff]
    %v1039 = vld [vmem:[#allocation3 + $0x2f0] sm:$0xff]
    %v1040 = vld [vmem:[#allocation3 + $0x2f8] sm:$0xff]
    %v1041 = vld [vmem:[#allocation3 + $0x300] sm:$0xff]
    %v1042 = vld [vmem:[#allocation3 + $0x308] sm:$0xff]
    %v1043 = vld [vmem:[#allocation3 + $0x310] sm:$0xff]
    %v1044 = vld [vmem:[#allocation3 + $0x318] sm:$0xff]
    %v1045 = vld [vmem:[#allocation3 + $0x320] sm:$0xff]
    %v1046 = vld [vmem:[#allocation3 + $0x328] sm:$0xff]
    %v1047 = vld [vmem:[#allocation3 + $0x330] sm:$0xff]
    %v1048 = vld [vmem:[#allocation3 + $0x338] sm:$0xff]
    %v1049 = vld [vmem:[#allocation3 + $0x340] sm:$0xff]
    %v1050 = vld [vmem:[#allocation3 + $0x348] sm:$0xff]
    %v1051 = vld [vmem:[#allocation3 + $0x350] sm:$0xff]
    %v1052 = vld [vmem:[#allocation3 + $0x358] sm:$0xff]
    %v1053 = vld [vmem:[#allocation3 + $0x360] sm:$0xff]
    %v1054 = vld [vmem:[#allocation3 + $0x368] sm:$0xff]
    %v1055 = vld [vmem:[#allocation3 + $0x370] sm:$0xff]
    %v1056 = vld [vmem:[#allocation3 + $0x378] sm:$0xff]
    %v1057 = vld [vmem:[#allocation3 + $0x380] sm:$0xff]
    %v1058 = vld [vmem:[#allocation3 + $0x388] sm:$0xff]
    %v1059 = vld [vmem:[#allocation3 + $0x390] sm:$0xff]
    %v1060 = vld [vmem:[#allocation3 + $0x398] sm:$0xff]
    %v1061 = vld [vmem:[#allocation3 + $0x3a0] sm:$0xff]
    %v1062 = vld [vmem:[#allocation3 + $0x3a8] sm:$0xff]
    %v1063 = vld [vmem:[#allocation3 + $0x3b0] sm:$0xff]
    %v1064 = vld [vmem:[#allocation3 + $0x3b8] sm:$0xff]
    %v1065 = vld [vmem:[#allocation3 + $0x3c0] sm:$0xff]
    %v1066 = vld [vmem:[#allocation3 + $0x3c8] sm:$0xff]
    %v1067 = vld [vmem:[#allocation3 + $0x3d0] sm:$0xff]
    %v1068 = vld [vmem:[#allocation3 + $0x3d8] sm:$0xff]
    %v1069 = vld [vmem:[#allocation3 + $0x3e0] sm:$0xff]
    %v1070 = vld [vmem:[#allocation3 + $0x3e8] sm:$0xff]
    %v1071 = vld [vmem:[#allocation3 + $0x3f0] sm:$0xff]
    %v1072 = vld [vmem:[#allocation3 + $0x3f8] sm:$0xff]
    %v1073 = vld [vmem:[%s8] sm:$0xf]
    %v1075 = vlaneseq
    %v1076 = vshrl.u32 %v1075, 7
    %v1077 = vsub.s32 0, %v1076
    %v1078 = vrot.slane %v1073, %v1077
    %v1079 = vlaneseq
    %v1080 = vshrl.u32 %v1079, 7
    %v1081 = vsub.s32 1, %v1080
    %v1082 = vrot.slane %v1073, %v1081
    %v1083 = vlaneseq
    %v1084 = vshrl.u32 %v1083, 7
    %v1085 = vsub.s32 2, %v1084
    %v1086 = vrot.slane %v1073, %v1085
    %v1087 = vlaneseq
    %v1088 = vshrl.u32 %v1087, 7
    %v1089 = vsub.s32 3, %v1088
    %v1090 = vrot.slane %v1073, %v1089
    %v1223 = vunpack.c.l.b16 %v945
    %v1224 = vunpack.c.h.b16 %v945
    %v1225 = vunpack.c.l.b16 %v946
    %v1226 = vunpack.c.h.b16 %v946
    %v1227 = vunpack.c.l.b16 %v947
    %v1228 = vunpack.c.h.b16 %v947
    %v1229 = vunpack.c.l.b16 %v948
    %v1230 = vunpack.c.h.b16 %v948
    %v1231 = vunpack.c.l.b16 %v949
    %v1232 = vunpack.c.h.b16 %v949
    %v1233 = vunpack.c.l.b16 %v950
    %v1234 = vunpack.c.h.b16 %v950
    %v1235 = vunpack.c.l.b16 %v951
    %v1236 = vunpack.c.h.b16 %v951
    %v1237 = vunpack.c.l.b16 %v952
    %v1238 = vunpack.c.h.b16 %v952
    %v1239 = vunpack.c.l.b16 %v953
    %v1240 = vunpack.c.h.b16 %v953
    %v1241 = vunpack.c.l.b16 %v954
    %v1242 = vunpack.c.h.b16 %v954
    %v1243 = vunpack.c.l.b16 %v955
    %v1244 = vunpack.c.h.b16 %v955
    %v1245 = vunpack.c.l.b16 %v956
    %v1246 = vunpack.c.h.b16 %v956
    %v1247 = vunpack.c.l.b16 %v957
    %v1248 = vunpack.c.h.b16 %v957
    %v1249 = vunpack.c.l.b16 %v958
    %v1250 = vunpack.c.h.b16 %v958
    %v1251 = vunpack.c.l.b16 %v959
    %v1252 = vunpack.c.h.b16 %v959
    %v1253 = vunpack.c.l.b16 %v960
    %v1254 = vunpack.c.h.b16 %v960
    %v1255 = vunpack.c.l.b16 %v961
    %v1256 = vunpack.c.h.b16 %v961
    %v1257 = vunpack.c.l.b16 %v962
    %v1258 = vunpack.c.h.b16 %v962
    %v1259 = vunpack.c.l.b16 %v963
    %v1260 = vunpack.c.h.b16 %v963
    %v1261 = vunpack.c.l.b16 %v964
    %v1262 = vunpack.c.h.b16 %v964
    %v1263 = vunpack.c.l.b16 %v965
    %v1264 = vunpack.c.h.b16 %v965
    %v1265 = vunpack.c.l.b16 %v966
    %v1266 = vunpack.c.h.b16 %v966
    %v1267 = vunpack.c.l.b16 %v967
    %v1268 = vunpack.c.h.b16 %v967
    %v1269 = vunpack.c.l.b16 %v968
    %v1270 = vunpack.c.h.b16 %v968
    %v1271 = vunpack.c.l.b16 %v969
    %v1272 = vunpack.c.h.b16 %v969
    %v1273 = vunpack.c.l.b16 %v970
    %v1274 = vunpack.c.h.b16 %v970
    %v1275 = vunpack.c.l.b16 %v971
    %v1276 = vunpack.c.h.b16 %v971
    %v1277 = vunpack.c.l.b16 %v972
    %v1278 = vunpack.c.h.b16 %v972
    %v1279 = vunpack.c.l.b16 %v973
    %v1280 = vunpack.c.h.b16 %v973
    %v1281 = vunpack.c.l.b16 %v974
    %v1282 = vunpack.c.h.b16 %v974
    %v1283 = vunpack.c.l.b16 %v975
    %v1284 = vunpack.c.h.b16 %v975
    %v1285 = vunpack.c.l.b16 %v976
    %v1286 = vunpack.c.h.b16 %v976
    %v1287 = vunpack.c.l.b16 %v977
    %v1288 = vunpack.c.h.b16 %v977
    %v1289 = vunpack.c.l.b16 %v978
    %v1290 = vunpack.c.h.b16 %v978
    %v1291 = vunpack.c.l.b16 %v979
    %v1292 = vunpack.c.h.b16 %v979
    %v1293 = vunpack.c.l.b16 %v980
    %v1294 = vunpack.c.h.b16 %v980
    %v1295 = vunpack.c.l.b16 %v981
    %v1296 = vunpack.c.h.b16 %v981
    %v1297 = vunpack.c.l.b16 %v982
    %v1298 = vunpack.c.h.b16 %v982
    %v1299 = vunpack.c.l.b16 %v983
    %v1300 = vunpack.c.h.b16 %v983
    %v1301 = vunpack.c.l.b16 %v984
    %v1302 = vunpack.c.h.b16 %v984
    %v1303 = vunpack.c.l.b16 %v985
    %v1304 = vunpack.c.h.b16 %v985
    %v1305 = vunpack.c.l.b16 %v986
    %v1306 = vunpack.c.h.b16 %v986
    %v1307 = vunpack.c.l.b16 %v987
    %v1308 = vunpack.c.h.b16 %v987
    %v1309 = vunpack.c.l.b16 %v988
    %v1310 = vunpack.c.h.b16 %v988
    %v1311 = vunpack.c.l.b16 %v989
    %v1312 = vunpack.c.h.b16 %v989
    %v1313 = vunpack.c.l.b16 %v990
    %v1314 = vunpack.c.h.b16 %v990
    %v1315 = vunpack.c.l.b16 %v991
    %v1316 = vunpack.c.h.b16 %v991
    %v1317 = vunpack.c.l.b16 %v992
    %v1318 = vunpack.c.h.b16 %v992
    %v1319 = vunpack.c.l.b16 %v993
    %v1320 = vunpack.c.h.b16 %v993
    %v1321 = vunpack.c.l.b16 %v994
    %v1322 = vunpack.c.h.b16 %v994
    %v1323 = vunpack.c.l.b16 %v995
    %v1324 = vunpack.c.h.b16 %v995
    %v1325 = vunpack.c.l.b16 %v996
    %v1326 = vunpack.c.h.b16 %v996
    %v1327 = vunpack.c.l.b16 %v997
    %v1328 = vunpack.c.h.b16 %v997
    %v1329 = vunpack.c.l.b16 %v998
    %v1330 = vunpack.c.h.b16 %v998
    %v1331 = vunpack.c.l.b16 %v999
    %v1332 = vunpack.c.h.b16 %v999
    %v1333 = vunpack.c.l.b16 %v1000
    %v1334 = vunpack.c.h.b16 %v1000
    %v1335 = vunpack.c.l.b16 %v1001
    %v1336 = vunpack.c.h.b16 %v1001
    %v1337 = vunpack.c.l.b16 %v1002
    %v1338 = vunpack.c.h.b16 %v1002
    %v1339 = vunpack.c.l.b16 %v1003
    %v1340 = vunpack.c.h.b16 %v1003
    %v1341 = vunpack.c.l.b16 %v1004
    %v1342 = vunpack.c.h.b16 %v1004
    %v1343 = vunpack.c.l.b16 %v1005
    %v1344 = vunpack.c.h.b16 %v1005
    %v1345 = vunpack.c.l.b16 %v1006
    %v1346 = vunpack.c.h.b16 %v1006
    %v1347 = vunpack.c.l.b16 %v1007
    %v1348 = vunpack.c.h.b16 %v1007
    %v1349 = vunpack.c.l.b16 %v1008
    %v1350 = vunpack.c.h.b16 %v1008
    %v1351 = vunpack.c.l.b16 %v1009
    %v1352 = vunpack.c.h.b16 %v1009
    %v1353 = vunpack.c.l.b16 %v1010
    %v1354 = vunpack.c.h.b16 %v1010
    %v1355 = vunpack.c.l.b16 %v1011
    %v1356 = vunpack.c.h.b16 %v1011
    %v1357 = vunpack.c.l.b16 %v1012
    %v1358 = vunpack.c.h.b16 %v1012
    %v1359 = vunpack.c.l.b16 %v1013
    %v1360 = vunpack.c.h.b16 %v1013
    %v1361 = vunpack.c.l.b16 %v1014
    %v1362 = vunpack.c.h.b16 %v1014
    %v1363 = vunpack.c.l.b16 %v1015
    %v1364 = vunpack.c.h.b16 %v1015
    %v1365 = vunpack.c.l.b16 %v1016
    %v1366 = vunpack.c.h.b16 %v1016
    %v1367 = vunpack.c.l.b16 %v1017
    %v1368 = vunpack.c.h.b16 %v1017
    %v1369 = vunpack.c.l.b16 %v1018
    %v1370 = vunpack.c.h.b16 %v1018
    %v1371 = vunpack.c.l.b16 %v1019
    %v1372 = vunpack.c.h.b16 %v1019
    %v1373 = vunpack.c.l.b16 %v1020
    %v1374 = vunpack.c.h.b16 %v1020
    %v1375 = vunpack.c.l.b16 %v1021
    %v1376 = vunpack.c.h.b16 %v1021
    %v1377 = vunpack.c.l.b16 %v1022
    %v1378 = vunpack.c.h.b16 %v1022
    %v1379 = vunpack.c.l.b16 %v1023
    %v1380 = vunpack.c.h.b16 %v1023
    %v1381 = vunpack.c.l.b16 %v1024
    %v1382 = vunpack.c.h.b16 %v1024
    %v1383 = vunpack.c.l.b16 %v1025
    %v1384 = vunpack.c.h.b16 %v1025
    %v1385 = vunpack.c.l.b16 %v1026
    %v1386 = vunpack.c.h.b16 %v1026
    %v1387 = vunpack.c.l.b16 %v1027
    %v1388 = vunpack.c.h.b16 %v1027
    %v1389 = vunpack.c.l.b16 %v1028
    %v1390 = vunpack.c.h.b16 %v1028
    %v1391 = vunpack.c.l.b16 %v1029
    %v1392 = vunpack.c.h.b16 %v1029
    %v1393 = vunpack.c.l.b16 %v1030
    %v1394 = vunpack.c.h.b16 %v1030
    %v1395 = vunpack.c.l.b16 %v1031
    %v1396 = vunpack.c.h.b16 %v1031
    %v1397 = vunpack.c.l.b16 %v1032
    %v1398 = vunpack.c.h.b16 %v1032
    %v1399 = vunpack.c.l.b16 %v1033
    %v1400 = vunpack.c.h.b16 %v1033
    %v1401 = vunpack.c.l.b16 %v1034
    %v1402 = vunpack.c.h.b16 %v1034
    %v1403 = vunpack.c.l.b16 %v1035
    %v1404 = vunpack.c.h.b16 %v1035
    %v1405 = vunpack.c.l.b16 %v1036
    %v1406 = vunpack.c.h.b16 %v1036
    %v1407 = vunpack.c.l.b16 %v1037
    %v1408 = vunpack.c.h.b16 %v1037
    %v1409 = vunpack.c.l.b16 %v1038
    %v1410 = vunpack.c.h.b16 %v1038
    %v1411 = vunpack.c.l.b16 %v1039
    %v1412 = vunpack.c.h.b16 %v1039
    %v1413 = vunpack.c.l.b16 %v1040
    %v1414 = vunpack.c.h.b16 %v1040
    %v1415 = vunpack.c.l.b16 %v1041
    %v1416 = vunpack.c.h.b16 %v1041
    %v1417 = vunpack.c.l.b16 %v1042
    %v1418 = vunpack.c.h.b16 %v1042
    %v1419 = vunpack.c.l.b16 %v1043
    %v1420 = vunpack.c.h.b16 %v1043
    %v1421 = vunpack.c.l.b16 %v1044
    %v1422 = vunpack.c.h.b16 %v1044
    %v1423 = vunpack.c.l.b16 %v1045
    %v1424 = vunpack.c.h.b16 %v1045
    %v1425 = vunpack.c.l.b16 %v1046
    %v1426 = vunpack.c.h.b16 %v1046
    %v1427 = vunpack.c.l.b16 %v1047
    %v1428 = vunpack.c.h.b16 %v1047
    %v1429 = vunpack.c.l.b16 %v1048
    %v1430 = vunpack.c.h.b16 %v1048
    %v1431 = vunpack.c.l.b16 %v1049
    %v1432 = vunpack.c.h.b16 %v1049
    %v1433 = vunpack.c.l.b16 %v1050
    %v1434 = vunpack.c.h.b16 %v1050
    %v1435 = vunpack.c.l.b16 %v1051
    %v1436 = vunpack.c.h.b16 %v1051
    %v1437 = vunpack.c.l.b16 %v1052
    %v1438 = vunpack.c.h.b16 %v1052
    %v1439 = vunpack.c.l.b16 %v1053
    %v1440 = vunpack.c.h.b16 %v1053
    %v1441 = vunpack.c.l.b16 %v1054
    %v1442 = vunpack.c.h.b16 %v1054
    %v1443 = vunpack.c.l.b16 %v1055
    %v1444 = vunpack.c.h.b16 %v1055
    %v1445 = vunpack.c.l.b16 %v1056
    %v1446 = vunpack.c.h.b16 %v1056
    %v1447 = vunpack.c.l.b16 %v1057
    %v1448 = vunpack.c.h.b16 %v1057
    %v1449 = vunpack.c.l.b16 %v1058
    %v1450 = vunpack.c.h.b16 %v1058
    %v1451 = vunpack.c.l.b16 %v1059
    %v1452 = vunpack.c.h.b16 %v1059
    %v1453 = vunpack.c.l.b16 %v1060
    %v1454 = vunpack.c.h.b16 %v1060
    %v1455 = vunpack.c.l.b16 %v1061
    %v1456 = vunpack.c.h.b16 %v1061
    %v1457 = vunpack.c.l.b16 %v1062
    %v1458 = vunpack.c.h.b16 %v1062
    %v1459 = vunpack.c.l.b16 %v1063
    %v1460 = vunpack.c.h.b16 %v1063
    %v1461 = vunpack.c.l.b16 %v1064
    %v1462 = vunpack.c.h.b16 %v1064
    %v1463 = vunpack.c.l.b16 %v1065
    %v1464 = vunpack.c.h.b16 %v1065
    %v1465 = vunpack.c.l.b16 %v1066
    %v1466 = vunpack.c.h.b16 %v1066
    %v1467 = vunpack.c.l.b16 %v1067
    %v1468 = vunpack.c.h.b16 %v1067
    %v1469 = vunpack.c.l.b16 %v1068
    %v1470 = vunpack.c.h.b16 %v1068
    %v1471 = vunpack.c.l.b16 %v1069
    %v1472 = vunpack.c.h.b16 %v1069
    %v1473 = vunpack.c.l.b16 %v1070
    %v1474 = vunpack.c.h.b16 %v1070
    %v1475 = vunpack.c.l.b16 %v1071
    %v1476 = vunpack.c.h.b16 %v1071
    %v1477 = vunpack.c.l.b16 %v1072
    %v1478 = vunpack.c.h.b16 %v1072
    %v1479 = vpack.c.b16 %v1227, %v1223
    %v1480 = vpack.c.b16 %v1228, %v1224
    %v1481 = vpack.c.b16 %v1229, %v1225
    %v1482 = vpack.c.b16 %v1230, %v1226
    %v1483 = vpack.c.b16 %v1235, %v1231
    %v1484 = vpack.c.b16 %v1236, %v1232
    %v1485 = vpack.c.b16 %v1237, %v1233
    %v1486 = vpack.c.b16 %v1238, %v1234
    %v1487 = vpack.c.b16 %v1243, %v1239
    %v1488 = vpack.c.b16 %v1244, %v1240
    %v1489 = vpack.c.b16 %v1245, %v1241
    %v1490 = vpack.c.b16 %v1246, %v1242
    %v1491 = vpack.c.b16 %v1251, %v1247
    %v1492 = vpack.c.b16 %v1252, %v1248
    %v1493 = vpack.c.b16 %v1253, %v1249
    %v1494 = vpack.c.b16 %v1254, %v1250
    %v1495 = vpack.c.b16 %v1259, %v1255
    %v1496 = vpack.c.b16 %v1260, %v1256
    %v1497 = vpack.c.b16 %v1261, %v1257
    %v1498 = vpack.c.b16 %v1262, %v1258
    %v1499 = vpack.c.b16 %v1267, %v1263
    %v1500 = vpack.c.b16 %v1268, %v1264
    %v1501 = vpack.c.b16 %v1269, %v1265
    %v1502 = vpack.c.b16 %v1270, %v1266
    %v1503 = vpack.c.b16 %v1275, %v1271
    %v1504 = vpack.c.b16 %v1276, %v1272
    %v1505 = vpack.c.b16 %v1277, %v1273
    %v1506 = vpack.c.b16 %v1278, %v1274
    %v1507 = vpack.c.b16 %v1283, %v1279
    %v1508 = vpack.c.b16 %v1284, %v1280
    %v1509 = vpack.c.b16 %v1285, %v1281
    %v1510 = vpack.c.b16 %v1286, %v1282
    %v1511 = vpack.c.b16 %v1291, %v1287
    %v1512 = vpack.c.b16 %v1292, %v1288
    %v1513 = vpack.c.b16 %v1293, %v1289
    %v1514 = vpack.c.b16 %v1294, %v1290
    %v1515 = vpack.c.b16 %v1299, %v1295
    %v1516 = vpack.c.b16 %v1300, %v1296
    %v1517 = vpack.c.b16 %v1301, %v1297
    %v1518 = vpack.c.b16 %v1302, %v1298
    %v1519 = vpack.c.b16 %v1307, %v1303
    %v1520 = vpack.c.b16 %v1308, %v1304
    %v1521 = vpack.c.b16 %v1309, %v1305
    %v1522 = vpack.c.b16 %v1310, %v1306
    %v1523 = vpack.c.b16 %v1315, %v1311
    %v1524 = vpack.c.b16 %v1316, %v1312
    %v1525 = vpack.c.b16 %v1317, %v1313
    %v1526 = vpack.c.b16 %v1318, %v1314
    %v1527 = vpack.c.b16 %v1323, %v1319
    %v1528 = vpack.c.b16 %v1324, %v1320
    %v1529 = vpack.c.b16 %v1325, %v1321
    %v1530 = vpack.c.b16 %v1326, %v1322
    %v1531 = vpack.c.b16 %v1331, %v1327
    %v1532 = vpack.c.b16 %v1332, %v1328
    %v1533 = vpack.c.b16 %v1333, %v1329
    %v1534 = vpack.c.b16 %v1334, %v1330
    %v1535 = vpack.c.b16 %v1339, %v1335
    %v1536 = vpack.c.b16 %v1340, %v1336
    %v1537 = vpack.c.b16 %v1341, %v1337
    %v1538 = vpack.c.b16 %v1342, %v1338
    %v1539 = vpack.c.b16 %v1347, %v1343
    %v1540 = vpack.c.b16 %v1348, %v1344
    %v1541 = vpack.c.b16 %v1349, %v1345
    %v1542 = vpack.c.b16 %v1350, %v1346
    %v1543 = vpack.c.b16 %v1355, %v1351
    %v1544 = vpack.c.b16 %v1356, %v1352
    %v1545 = vpack.c.b16 %v1357, %v1353
    %v1546 = vpack.c.b16 %v1358, %v1354
    %v1547 = vpack.c.b16 %v1363, %v1359
    %v1548 = vpack.c.b16 %v1364, %v1360
    %v1549 = vpack.c.b16 %v1365, %v1361
    %v1550 = vpack.c.b16 %v1366, %v1362
    %v1551 = vpack.c.b16 %v1371, %v1367
    %v1552 = vpack.c.b16 %v1372, %v1368
    %v1553 = vpack.c.b16 %v1373, %v1369
    %v1554 = vpack.c.b16 %v1374, %v1370
    %v1555 = vpack.c.b16 %v1379, %v1375
    %v1556 = vpack.c.b16 %v1380, %v1376
    %v1557 = vpack.c.b16 %v1381, %v1377
    %v1558 = vpack.c.b16 %v1382, %v1378
    %v1559 = vpack.c.b16 %v1387, %v1383
    %v1560 = vpack.c.b16 %v1388, %v1384
    %v1561 = vpack.c.b16 %v1389, %v1385
    %v1562 = vpack.c.b16 %v1390, %v1386
    %v1563 = vpack.c.b16 %v1395, %v1391
    %v1564 = vpack.c.b16 %v1396, %v1392
    %v1565 = vpack.c.b16 %v1397, %v1393
    %v1566 = vpack.c.b16 %v1398, %v1394
    %v1567 = vpack.c.b16 %v1403, %v1399
    %v1568 = vpack.c.b16 %v1404, %v1400
    %v1569 = vpack.c.b16 %v1405, %v1401
    %v1570 = vpack.c.b16 %v1406, %v1402
    %v1571 = vpack.c.b16 %v1411, %v1407
    %v1572 = vpack.c.b16 %v1412, %v1408
    %v1573 = vpack.c.b16 %v1413, %v1409
    %v1574 = vpack.c.b16 %v1414, %v1410
    %v1575 = vpack.c.b16 %v1419, %v1415
    %v1576 = vpack.c.b16 %v1420, %v1416
    %v1577 = vpack.c.b16 %v1421, %v1417
    %v1578 = vpack.c.b16 %v1422, %v1418
    %v1579 = vpack.c.b16 %v1427, %v1423
    %v1580 = vpack.c.b16 %v1428, %v1424
    %v1581 = vpack.c.b16 %v1429, %v1425
    %v1582 = vpack.c.b16 %v1430, %v1426
    %v1583 = vpack.c.b16 %v1435, %v1431
    %v1584 = vpack.c.b16 %v1436, %v1432
    %v1585 = vpack.c.b16 %v1437, %v1433
    %v1586 = vpack.c.b16 %v1438, %v1434
    %v1587 = vpack.c.b16 %v1443, %v1439
    %v1588 = vpack.c.b16 %v1444, %v1440
    %v1589 = vpack.c.b16 %v1445, %v1441
    %v1590 = vpack.c.b16 %v1446, %v1442
    %v1591 = vpack.c.b16 %v1451, %v1447
    %v1592 = vpack.c.b16 %v1452, %v1448
    %v1593 = vpack.c.b16 %v1453, %v1449
    %v1594 = vpack.c.b16 %v1454, %v1450
    %v1595 = vpack.c.b16 %v1459, %v1455
    %v1596 = vpack.c.b16 %v1460, %v1456
    %v1597 = vpack.c.b16 %v1461, %v1457
    %v1598 = vpack.c.b16 %v1462, %v1458
    %v1599 = vpack.c.b16 %v1467, %v1463
    %v1600 = vpack.c.b16 %v1468, %v1464
    %v1601 = vpack.c.b16 %v1469, %v1465
    %v1602 = vpack.c.b16 %v1470, %v1466
    %v1603 = vpack.c.b16 %v1475, %v1471
    %v1604 = vpack.c.b16 %v1476, %v1472
    %v1605 = vpack.c.b16 %v1477, %v1473
    %v1606 = vpack.c.b16 %v1478, %v1474
    %1735 = vmatprep.subr.bf16.mxu0 %v1508
    %1736 = vmatpush1.bf16.msra.mxu0 %v1507
    %1737 = vmatprep.subr.bf16.mxu0 %v1504
    %1738 = vmatpush1.bf16.msra.mxu0 %v1503
    %1739 = vmatprep.subr.bf16.mxu0 %v1500
    %1740 = vmatpush1.bf16.msra.mxu0 %v1499
    %1741 = vmatprep.subr.bf16.mxu0 %v1496
    %1742 = vmatpush1.bf16.msra.mxu0 %v1495
    %1743 = vmatprep.subr.bf16.mxu0 %v1492
    %1744 = vmatpush1.bf16.msra.mxu0 %v1491
    %1745 = vmatprep.subr.bf16.mxu0 %v1488
    %1746 = vmatpush1.bf16.msra.mxu0 %v1487
    %1747 = vmatprep.subr.bf16.mxu0 %v1484
    %1748 = vmatpush1.bf16.msra.mxu0 %v1483
    %1749 = vmatprep.subr.bf16.mxu0 %v1480
    %1750 = vmatpush1.bf16.msra.mxu0 %v1479
    %1751 = vmatprep.subr.bf16.mxu0 %v1540
    %1752 = vmatpush2.bf16.msra.mxu0 %v1539
    %1753 = vmatprep.subr.bf16.mxu0 %v1536
    %1754 = vmatpush2.bf16.msra.mxu0 %v1535
    %1755 = vmatprep.subr.bf16.mxu0 %v1532
    %1756 = vmatpush2.bf16.msra.mxu0 %v1531
    %1757 = vmatprep.subr.bf16.mxu0 %v1528
    %1758 = vmatpush2.bf16.msra.mxu0 %v1527
    %1759 = vmatprep.subr.bf16.mxu0 %v1524
    %1760 = vmatpush2.bf16.msra.mxu0 %v1523
    %1761 = vmatprep.subr.bf16.mxu0 %v1520
    %1762 = vmatpush2.bf16.msra.mxu0 %v1519
    %1763 = vmatprep.subr.bf16.mxu0 %v1516
    %1764 = vmatpush2.bf16.msra.mxu0 %v1515
    %1765 = vmatprep.subr.bf16.mxu0 %v1512
    %1766 = vmatpush2.bf16.msra.mxu0 %v1511
    %1767 = vmatprep.mubr.bf16.mxu0 %v942
    %1768 = vmatmul.mubr.bf16.gmra.mxu0 %v941
    %v1769 = vpop.f32.mrf.mxu0
    %v1770 = vadd.f32 %v1078, %v1769
    %v1771 = vpop.f32.mrf.mxu0
    %v1772 = vadd.f32 %v1082, %v1771
    %v1773 = vpop.f32.mrf.mxu0
    %v1774 = vpop.f32.mrf.mxu0
    %1775 = vdwg.mxu0
    %1776 = vmatprep.subr.bf16.mxu0 %v1572
    %1777 = vmatpush1.bf16.msra.mxu0 %v1571
    %1778 = vmatprep.subr.bf16.mxu0 %v1568
    %1779 = vmatpush1.bf16.msra.mxu0 %v1567
    %1780 = vmatprep.subr.bf16.mxu0 %v1564
    %1781 = vmatpush1.bf16.msra.mxu0 %v1563
    %1782 = vmatprep.subr.bf16.mxu0 %v1560
    %1783 = vmatpush1.bf16.msra.mxu0 %v1559
    %1784 = vmatprep.subr.bf16.mxu0 %v1556
    %1785 = vmatpush1.bf16.msra.mxu0 %v1555
    %1786 = vmatprep.subr.bf16.mxu0 %v1552
    %1787 = vmatpush1.bf16.msra.mxu0 %v1551
    %1788 = vmatprep.subr.bf16.mxu0 %v1548
    %1789 = vmatpush1.bf16.msra.mxu0 %v1547
    %1790 = vmatprep.subr.bf16.mxu0 %v1544
    %1791 = vmatpush1.bf16.msra.mxu0 %v1543
    %1792 = vmatprep.subr.bf16.mxu0 %v1604
    %1793 = vmatpush2.bf16.msra.mxu0 %v1603
    %1794 = vmatprep.subr.bf16.mxu0 %v1600
    %1795 = vmatpush2.bf16.msra.mxu0 %v1599
    %1796 = vmatprep.subr.bf16.mxu0 %v1596
    %1797 = vmatpush2.bf16.msra.mxu0 %v1595
    %1798 = vmatprep.subr.bf16.mxu0 %v1592
    %1799 = vmatpush2.bf16.msra.mxu0 %v1591
    %1800 = vmatprep.subr.bf16.mxu0 %v1588
    %1801 = vmatpush2.bf16.msra.mxu0 %v1587
    %1802 = vmatprep.subr.bf16.mxu0 %v1584
    %1803 = vmatpush2.bf16.msra.mxu0 %v1583
    %1804 = vmatprep.subr.bf16.mxu0 %v1580
    %1805 = vmatpush2.bf16.msra.mxu0 %v1579
    %1806 = vmatprep.subr.bf16.mxu0 %v1576
    %1807 = vmatpush2.bf16.msra.mxu0 %v1575
    %1808 = vmatprep.mubr.bf16.mxu0 %v944
    %1809 = vmatmul.mubr.bf16.gmra.mxu0 %v943
    %v1810 = vpop.f32.mrf.mxu0
    %v1811 = vadd.f32 %v1770, %v1810
    %v1812 = vpop.f32.mrf.mxu0
    %v1813 = vadd.f32 %v1772, %v1812
    %v1814 = vpop.f32.mrf.mxu0
    %v1815 = vpop.f32.mrf.mxu0
    %1816 = vdwg.mxu0
    %1817 = vmatprep.subr.bf16.mxu0 %v1510
    %1818 = vmatpush1.bf16.msra.mxu0 %v1509
    %1819 = vmatprep.subr.bf16.mxu0 %v1506
    %1820 = vmatpush1.bf16.msra.mxu0 %v1505
    %1821 = vmatprep.subr.bf16.mxu0 %v1502
    %1822 = vmatpush1.bf16.msra.mxu0 %v1501
    %1823 = vmatprep.subr.bf16.mxu0 %v1498
    %1824 = vmatpush1.bf16.msra.mxu0 %v1497
    %1825 = vmatprep.subr.bf16.mxu0 %v1494
    %1826 = vmatpush1.bf16.msra.mxu0 %v1493
    %1827 = vmatprep.subr.bf16.mxu0 %v1490
    %1828 = vmatpush1.bf16.msra.mxu0 %v1489
    %1829 = vmatprep.subr.bf16.mxu0 %v1486
    %1830 = vmatpush1.bf16.msra.mxu0 %v1485
    %1831 = vmatprep.subr.bf16.mxu0 %v1482
    %1832 = vmatpush1.bf16.msra.mxu0 %v1481
    %1833 = vmatprep.subr.bf16.mxu0 %v1542
    %1834 = vmatpush2.bf16.msra.mxu0 %v1541
    %1835 = vmatprep.subr.bf16.mxu0 %v1538
    %1836 = vmatpush2.bf16.msra.mxu0 %v1537
    %1837 = vmatprep.subr.bf16.mxu0 %v1534
    %1838 = vmatpush2.bf16.msra.mxu0 %v1533
    %1839 = vmatprep.subr.bf16.mxu0 %v1530
    %1840 = vmatpush2.bf16.msra.mxu0 %v1529
    %1841 = vmatprep.subr.bf16.mxu0 %v1526
    %1842 = vmatpush2.bf16.msra.mxu0 %v1525
    %1843 = vmatprep.subr.bf16.mxu0 %v1522
    %1844 = vmatpush2.bf16.msra.mxu0 %v1521
    %1845 = vmatprep.subr.bf16.mxu0 %v1518
    %1846 = vmatpush2.bf16.msra.mxu0 %v1517
    %1847 = vmatprep.subr.bf16.mxu0 %v1514
    %1848 = vmatpush2.bf16.msra.mxu0 %v1513
    %1849 = vmatprep.mubr.bf16.mxu0 %v942
    %1850 = vmatmul.mubr.bf16.gmra.mxu0 %v941
    %v1851 = vpop.f32.mrf.mxu0
    %v1852 = vadd.f32 %v1086, %v1851
    %v1853 = vpop.f32.mrf.mxu0
    %v1854 = vadd.f32 %v1090, %v1853
    %v1855 = vpop.f32.mrf.mxu0
    %v1856 = vpop.f32.mrf.mxu0
    %1857 = vdwg.mxu0
    %1858 = vmatprep.subr.bf16.mxu0 %v1574
    %1859 = vmatpush1.bf16.msra.mxu0 %v1573
    %1860 = vmatprep.subr.bf16.mxu0 %v1570
    %1861 = vmatpush1.bf16.msra.mxu0 %v1569
    %1862 = vmatprep.subr.bf16.mxu0 %v1566
    %1863 = vmatpush1.bf16.msra.mxu0 %v1565
    %1864 = vmatprep.subr.bf16.mxu0 %v1562
    %1865 = vmatpush1.bf16.msra.mxu0 %v1561
    %1866 = vmatprep.subr.bf16.mxu0 %v1558
    %1867 = vmatpush1.bf16.msra.mxu0 %v1557
    %1868 = vmatprep.subr.bf16.mxu0 %v1554
    %1869 = vmatpush1.bf16.msra.mxu0 %v1553
    %1870 = vmatprep.subr.bf16.mxu0 %v1550
    %1871 = vmatpush1.bf16.msra.mxu0 %v1549
    %1872 = vmatprep.subr.bf16.mxu0 %v1546
    %1873 = vmatpush1.bf16.msra.mxu0 %v1545
    %1874 = vmatprep.subr.bf16.mxu0 %v1606
    %1875 = vmatpush2.bf16.msra.mxu0 %v1605
    %1876 = vmatprep.subr.bf16.mxu0 %v1602
    %1877 = vmatpush2.bf16.msra.mxu0 %v1601
    %1878 = vmatprep.subr.bf16.mxu0 %v1598
    %1879 = vmatpush2.bf16.msra.mxu0 %v1597
    %1880 = vmatprep.subr.bf16.mxu0 %v1594
    %1881 = vmatpush2.bf16.msra.mxu0 %v1593
    %1882 = vmatprep.subr.bf16.mxu0 %v1590
    %1883 = vmatpush2.bf16.msra.mxu0 %v1589
    %1884 = vmatprep.subr.bf16.mxu0 %v1586
    %1885 = vmatpush2.bf16.msra.mxu0 %v1585
    %1886 = vmatprep.subr.bf16.mxu0 %v1582
    %1887 = vmatpush2.bf16.msra.mxu0 %v1581
    %1888 = vmatprep.subr.bf16.mxu0 %v1578
    %1889 = vmatpush2.bf16.msra.mxu0 %v1577
    %1890 = vmatprep.mubr.bf16.mxu0 %v944
    %1891 = vmatmul.mubr.bf16.gmra.mxu0 %v943
    %v1892 = vpop.f32.mrf.mxu0
    %v1893 = vadd.f32 %v1852, %v1892
    %v1894 = vpop.f32.mrf.mxu0
    %v1895 = vadd.f32 %v1854, %v1894
    %v1896 = vpop.f32.mrf.mxu0
    %v1897 = vpop.f32.mrf.mxu0
    %1898 = vdwg.mxu0
    %v1899 = vadd.f32 %v1811, %v1813
    %v1900 = vadd.f32 %v1899, %v1893
    %v1901 = vadd.f32 %v1900, %v1895
    %1902 = vadd.xlane.f32.xlu0 %v1901
    %v1903 = vpop.xlane.xlu0 %1902
    %v1904 = vmul.f32 %v1903, 0.0022222223
    %v1905 = vmul.f32 %v1811, %v1811
    %v1906 = vmul.f32 %v1813, %v1813
    %v1907 = vmul.f32 %v1893, %v1893
    %v1908 = vmul.f32 %v1895, %v1895
    %v1909 = vadd.f32 %v1905, %v1906
    %v1910 = vadd.f32 %v1909, %v1907
    %v1911 = vadd.f32 %v1910, %v1908
    %1912 = vadd.xlane.f32.xlu0 %v1911
    %v1913 = vpop.xlane.xlu0 %1912
    %v1914 = vmul.f32 %v1913, 0.0022222223
    %v1915 = vmul.f32 %v1904, %v1904
    %v1916 = vsub.f32 %v1914, %v1915
    %v1917 = vmax.f32 %v1916, 0.0
    %v1918 = vadd.f32 %v1917, 1e-05
    %v1919 = vrsqrt.pop %v1918
    %v1920 = vsub.f32 %v1811, %v1904
    %v1921 = vsub.f32 %v1813, %v1904
    %v1922 = vsub.f32 %v1893, %v1904
    %v1923 = vsub.f32 %v1895, %v1904
    %v1924 = vmul.f32 %v1920, %v1919
    %v1925 = vmul.f32 %v1921, %v1919
    %v1926 = vmul.f32 %v1922, %v1919
    %v1927 = vmul.f32 %v1923, %v1919
    %v1928 = vld [vmem:[%s9] sm:$0xf]
    %v1930 = vlaneseq
    %v1931 = vshrl.u32 %v1930, 7
    %v1932 = vsub.s32 0, %v1931
    %v1933 = vrot.slane %v1928, %v1932
    %v1934 = vlaneseq
    %v1935 = vshrl.u32 %v1934, 7
    %v1936 = vsub.s32 1, %v1935
    %v1937 = vrot.slane %v1928, %v1936
    %v1938 = vlaneseq
    %v1939 = vshrl.u32 %v1938, 7
    %v1940 = vsub.s32 2, %v1939
    %v1941 = vrot.slane %v1928, %v1940
    %v1942 = vlaneseq
    %v1943 = vshrl.u32 %v1942, 7
    %v1944 = vsub.s32 3, %v1943
    %v1945 = vrot.slane %v1928, %v1944
    %v1950 = vmul.f32 %v1924, %v1933
    %v1951 = vmul.f32 %v1925, %v1937
    %v1952 = vmul.f32 %v1926, %v1941
    %v1953 = vmul.f32 %v1927, %v1945
    %v1954 = vld [vmem:[%s10] sm:$0xf]
    %v1956 = vlaneseq
    %v1957 = vshrl.u32 %v1956, 7
    %v1958 = vsub.s32 0, %v1957
    %v1959 = vrot.slane %v1954, %v1958
    %v1960 = vlaneseq
    %v1961 = vshrl.u32 %v1960, 7
    %v1962 = vsub.s32 1, %v1961
    %v1963 = vrot.slane %v1954, %v1962
    %v1964 = vlaneseq
    %v1965 = vshrl.u32 %v1964, 7
    %v1966 = vsub.s32 2, %v1965
    %v1967 = vrot.slane %v1954, %v1966
    %v1968 = vlaneseq
    %v1969 = vshrl.u32 %v1968, 7
    %v1970 = vsub.s32 3, %v1969
    %v1971 = vrot.slane %v1954, %v1970
    %v1976 = vadd.f32 %v1950, %v1959
    %v1977 = vadd.f32 %v1951, %v1963
    %v1978 = vadd.f32 %v1952, %v1967
    %v1979 = vadd.f32 %v1953, %v1971
    %v1980 = vmax.f32 %v1976, 0.0
    %v1981 = vmax.f32 %v1977, 0.0
    %v1982 = vmax.f32 %v1978, 0.0
    %v1983 = vmax.f32 %v1979, 0.0
    %v1984 = vld [vmem:[%s11] sm:$0xf]
    %v1986 = vlaneseq
    %v1987 = vshrl.u32 %v1986, 7
    %v1988 = vsub.s32 0, %v1987
    %v1989 = vrot.slane %v1984, %v1988
    %v1990 = vlaneseq
    %v1991 = vshrl.u32 %v1990, 7
    %v1992 = vsub.s32 1, %v1991
    %v1993 = vrot.slane %v1984, %v1992
    %v1994 = vlaneseq
    %v1995 = vshrl.u32 %v1994, 7
    %v1996 = vsub.s32 2, %v1995
    %v1997 = vrot.slane %v1984, %v1996
    %v1998 = vlaneseq
    %v1999 = vshrl.u32 %v1998, 7
    %v2000 = vsub.s32 3, %v1999
    %v2001 = vrot.slane %v1984, %v2000
    %v2006 = vmul.f32 %v1980, %v1989
    %v2007 = vmul.f32 %v1981, %v1993
    %v2008 = vmul.f32 %v1982, %v1997
    %v2009 = vmul.f32 %v1983, %v2001
    %v2010 = vadd.f32 %v2006, %v2007
    %v2011 = vadd.f32 %v2010, %v2008
    %v2012 = vadd.f32 %v2011, %v2009
    %2013 = vadd.xlane.f32.xlu0 %v2012
    %v2014 = vpop.xlane.xlu0 %2013
    %v2015 = vld [vmem:[#allocation2] sm:$0x1]
    %v2017 = vlaneseq
    %v2018 = vshrl.u32 %v2017, 7
    %v2019 = vsub.s32 0, %v2018
    %v2020 = vrot.slane %v2015, %v2019
    %v2022 = vadd.f32 %v2014, %v2020
    %vm2023 = vcmask 7168
    %2024 = vst.msk [vmem:[%s13] sm:$0xff] %vm2023, %v2022
    // Predicated region
    $region58: #{tpu_custom_call.1} parent=1 // pred_check
      _
    $region59: #{tpu_custom_call.1} parent=1 // pred_check_branch
      %2026 = sbr.rel (0) target = $region61
    $region60: #{tpu_custom_call.1} parent=1 // pred_region
      _
    $region61: #{tpu_custom_call.1} parent=1 // pred_fallthru
      _
    // Predicated region
    $region62: #{tpu_custom_call.1} parent=1 // pred_check
      _
    $region63: #{tpu_custom_call.1} parent=1 // pred_check_branch
      %2028 = sbr.rel (0) target = $region65
    $region64: #{tpu_custom_call.1} parent=1 // pred_region
      _
    $region65: #{tpu_custom_call.1} parent=1 // pred_fallthru
      _
    %2029 = vsyncpa [#allocation4], 1

</llo_original>
